<compile_context>
chip_gen: v7x
topology: tpu7x:2x2x1
jax: 0.10.0
libtpu: 0.0.40
codegen_flags: <defaults>
</compile_context>

<pallas_src>
import functools

import jax
import jax.numpy as jnp
from jax.experimental import pallas as pl
from jax.experimental.pallas import tpu as pltpu


# ---------------------------------------------------------------------------
# Fused forward kernel: gnn1 -> sigmoid -> gnn2 -> emotions -> classify head
# ---------------------------------------------------------------------------
def _fused_forward_kernel(a_ref, x_ref, w1_ref, w2_ref, lwt_ref, lwb_ref, lb_ref,
                          fw_ref, fb_ref, logp_ref, em_ref, *, R, H):
    x = x_ref[...]                                             # [N, H]

    def relational_layer(xin, w_all):
        # One lane-dense projection for all relations: [N,H] @ [H,R*H] -> [N,R*H]
        z = jnp.dot(xin, w_all, preferred_element_type=jnp.float32)
        acc = jnp.zeros((xin.shape[0], H), jnp.float32)
        # Static unroll over relations (R is small); adjacency already scaled by 1/deg.
        for r in range(R):
            acc = acc + jnp.dot(a_ref[r], z[:, r * H:(r + 1) * H],
                                preferred_element_type=jnp.float32)
        return acc

    out1 = jax.nn.sigmoid(relational_layer(x, w1_ref[...]))    # gnn1 + dropout(id) + sigmoid
    out2 = relational_layer(out1, w2_ref[...])                 # gnn2

    # emotions = concat([x, out2], axis=1), written directly as two lane slices.
    em_ref[:, :H] = x.astype(em_ref.dtype)
    em_ref[:, H:] = out2.astype(em_ref.dtype)

    # classify head: relu(linear(emotions)) -> dropout(id) -> smax_fc -> log_softmax
    # linear(emotions) == x @ W_lin[:H] + out2 @ W_lin[H:]  (avoids in-kernel concat)
    hidden = (jnp.dot(x, lwt_ref[...], preferred_element_type=jnp.float32)
              + jnp.dot(out2, lwb_ref[...], preferred_element_type=jnp.float32)
              + lb_ref[...])
    hidden = jnp.maximum(hidden, 0.0)
    logits = jnp.dot(hidden, fw_ref[...], preferred_element_type=jnp.float32) + fb_ref[...]
    m = jnp.max(logits, axis=1, keepdims=True)
    zc = logits - m
    lse = jnp.log(jnp.sum(jnp.exp(zc), axis=1, keepdims=True))
    logp_ref[...] = (zc - lse).astype(logp_ref.dtype)


def _fused_forward(a_scaled, x, w1_all, w2_all, lw_top, lw_bot, lin_b,
                   fc_w_pad, fc_b_pad, *, R, H):
    N = x.shape[0]
    C_pad = fc_w_pad.shape[1]
    vmem_spec = pl.BlockSpec(memory_space=pltpu.MemorySpace.VMEM)
    kernel = functools.partial(_fused_forward_kernel, R=R, H=H)
    return pl.pallas_call(
        kernel,
        out_shape=(jax.ShapeDtypeStruct((N, C_pad), jnp.float32),   # padded log-probs
                   jax.ShapeDtypeStruct((N, 2 * H), jnp.float32)),  # emotions
        in_specs=[vmem_spec] * 9,
        out_specs=(vmem_spec, vmem_spec),
    )(a_scaled, x, w1_all, w2_all, lw_top, lw_bot, lin_b, fc_w_pad, fc_b_pad)


# ---------------------------------------------------------------------------
# Full forward (glue in plain JAX: dense adjacency construction, weight packing)
# ---------------------------------------------------------------------------
def graph_network_forward(params, speaker, x, edge_index, edge_norm, edge_type,
                          seq_lengths, umask, num_relations):
    del speaker, seq_lengths, umask  # unused in the 'GGCN' path / classify_node_features
    N, H = x.shape
    R = num_relations
    C = params["fc_w"].shape[1]

    # flow='target_to_source': aggregate at i = edge_index[0], gather from j = edge_index[1]
    dst = edge_index[0]
    src = edge_index[1]
    vals = (edge_norm * 2.0).astype(jnp.float32)               # forward passes edge_norm * 2

    adj = jnp.zeros((R, N, N), jnp.float32).at[edge_type, dst, src].add(vals)
    deg = jnp.zeros((N,), jnp.float32).at[dst].add(1.0)
    inv_deg = 1.0 / jnp.maximum(deg, 1.0)
    a_scaled = adj * inv_deg[None, :, None]                    # mean aggregation folded into A

    # Pack relation weights so the projection is one lane-dense matmul:
    # W_all[:, r*H:(r+1)*H] = W_r
    w1_all = jnp.transpose(params["w_gnn1"], (1, 0, 2)).reshape(H, R * H)
    w2_all = jnp.transpose(params["w_gnn2"], (1, 0, 2)).reshape(H, R * H)

    # Split linear(2H -> H) so the kernel needs no in-kernel concat.
    lw_top = params["lin_w"][:H, :]
    lw_bot = params["lin_w"][H:, :]

    # Pad the classifier to a lane-dense (multiple of 128) class dimension.
    C_pad = pl.cdiv(C, 128) * 128
    fc_w_pad = jnp.zeros((H, C_pad), jnp.float32).at[:, :C].set(params["fc_w"])
    fc_b_pad = jnp.full((1, C_pad), -1e30, jnp.float32).at[:, :C].set(params["fc_b"])

    log_prob_pad, emotions = _fused_forward(
        a_scaled, x, w1_all, w2_all, lw_top, lw_bot, params["lin_b"],
        fc_w_pad, fc_b_pad, R=R, H=H)

    return log_prob_pad[:, :C], x, emotions


# ---------------------------------------------------------------------------
# Pure-JAX reference (for a correctness self-check)
# ---------------------------------------------------------------------------
def _reference_forward(params, x, edge_index, edge_norm, edge_type, num_relations):
    N, H = x.shape
    R = num_relations
    dst, src = edge_index[0], edge_index[1]
    vals = (edge_norm * 2.0).astype(jnp.float32)
    adj = jnp.zeros((R, N, N), jnp.float32).at[edge_type, dst, src].add(vals)
    deg = jnp.zeros((N,), jnp.float32).at[dst].add(1.0)
    inv_deg = (1.0 / jnp.maximum(deg, 1.0)).reshape(N, 1)

    def layer(xin, w):
        acc = jnp.zeros((N, H), jnp.float32)
        for r in range(R):
            acc = acc + adj[r] @ (xin @ w[r])
        return acc * inv_deg

    out1 = jax.nn.sigmoid(layer(x, params["w_gnn1"]))
    out2 = layer(out1, params["w_gnn2"])
    emotions = jnp.concatenate([x, out2], axis=1)
    hidden = jax.nn.relu(emotions @ params["lin_w"] + params["lin_b"][0])
    logits = hidden @ params["fc_w"] + params["fc_b"][0]
    return jax.nn.log_softmax(logits, axis=1), emotions


if __name__ == "__main__":
    # Small deterministic shapes
    N = 16            # number of utterance nodes
    H = 32            # hidden_size
    R = 4             # num_relations
    C = 8             # num_classes
    E = 48            # number of edges

    key = jax.random.PRNGKey(0)
    keys = jax.random.split(key, 10)

    x = jax.random.normal(keys[0], (N, H), jnp.float32)
    edge_src = jax.random.randint(keys[1], (E,), 0, N)
    edge_dst = jax.random.randint(keys[2], (E,), 0, N)
    edge_index = jnp.stack([edge_dst, edge_src], axis=0)        # [2, E]
    edge_type = jax.random.randint(keys[3], (E,), 0, R)
    edge_norm = jax.random.uniform(keys[4], (E,), jnp.float32)
    speaker = jax.random.randint(keys[5], (N,), 0, 2)
    seq_lengths = jnp.array([N], jnp.int32)
    umask = jnp.ones((1, N), jnp.float32)

    # Deterministic parameter init (shapes follow GraphNetwork.__init__)
    params = {
        "w_gnn1": 0.1 * jax.random.normal(keys[6], (R, H, H), jnp.float32),   # gnn1.w viewed as (R, H, H)
        "w_gnn2": 0.1 * jax.random.normal(keys[7], (R, H, H), jnp.float32),   # gnn2.w
        "lin_w": 0.1 * jax.random.normal(keys[8], (2 * H, H), jnp.float32),   # nn.Linear(2H, H), stored transposed
        "lin_b": jnp.zeros((1, H), jnp.float32),
        "fc_w": 0.1 * jax.random.normal(keys[9], (H, C), jnp.float32),        # nn.Linear(H, C), stored transposed
        "fc_b": jnp.zeros((1, C), jnp.float32),
    }

    log_prob, x_out, emotions = graph_network_forward(
        params, speaker, x, edge_index, edge_norm, edge_type, seq_lengths, umask, R)
    jax.block_until_ready((log_prob, x_out, emotions))

    # Self-check against pure-JAX reference
    ref_log_prob, ref_emotions = _reference_forward(params, x, edge_index, edge_norm, edge_type, R)
    assert jnp.allclose(log_prob, ref_log_prob, atol=1e-4, rtol=1e-4)
    assert jnp.allclose(emotions, ref_emotions, atol=1e-4, rtol=1e-4)
    assert log_prob.shape == (N, C) and emotions.shape == (N, 2 * H)

    print("KERNEL_OK")
</pallas_src>

<mosaic_0001>
module attributes {stable_mosaic.version = 11 : i64} {
  func.func @_fused_forward_kernel(%arg0: memref<4x16x16xf32, #tpu.memory_space<vmem>>, %arg1: memref<16x32xf32, #tpu.memory_space<vmem>>, %arg2: memref<32x128xf32, #tpu.memory_space<vmem>>, %arg3: memref<32x128xf32, #tpu.memory_space<vmem>>, %arg4: memref<32x32xf32, #tpu.memory_space<vmem>>, %arg5: memref<32x32xf32, #tpu.memory_space<vmem>>, %arg6: memref<1x32xf32, #tpu.memory_space<vmem>>, %arg7: memref<32x128xf32, #tpu.memory_space<vmem>>, %arg8: memref<1x128xf32, #tpu.memory_space<vmem>>, %arg9: memref<16x128xf32, #tpu.memory_space<vmem>>, %arg10: memref<16x64xf32, #tpu.memory_space<vmem>>) attributes {dimension_semantics = [], scalar_prefetch = 0 : i64, scratch_operands = 0 : i64, tpu.core_type = #tpu.core_type<tc>} {
    %c0 = arith.constant 0 : index
    %c0_0 = arith.constant 0 : index
    %0 = vector.load %arg1[%c0, %c0_0] : memref<16x32xf32, #tpu.memory_space<vmem>>, vector<16x32xf32>
    %c0_1 = arith.constant 0 : index
    %c0_2 = arith.constant 0 : index
    %1 = vector.load %arg2[%c0_1, %c0_2] : memref<32x128xf32, #tpu.memory_space<vmem>>, vector<32x128xf32>
    %cst = arith.constant dense<0.000000e+00> : vector<16x128xf32>
    %2 = tpu.matmul %0, %1, %cst {dimension_numbers = #tpu.dot_dimension_numbers<[1], [0], [0], [1], [0, 0, 1, 1], [], []>} : vector<16x32xf32>, vector<32x128xf32>, vector<16x128xf32> -> vector<16x128xf32>
    %cst_3 = arith.constant 0.000000e+00 : f32
    %3 = vector.broadcast %cst_3 : f32 to vector<16x32xf32>
    %c0_4 = arith.constant 0 : index
    %c0_5 = arith.constant 0 : index
    %c0_6 = arith.constant 0 : index
    %4 = vector.load %arg0[%c0_4, %c0_5, %c0_6] : memref<4x16x16xf32, #tpu.memory_space<vmem>>, vector<1x16x16xf32>
    %5 = vector.shape_cast %4 : vector<1x16x16xf32> to vector<16x16xf32>
    %6 = vector.extract_strided_slice %2 {offsets = [0, 0], sizes = [16, 32], strides = [1, 1]} : vector<16x128xf32> to vector<16x32xf32>
    %cst_7 = arith.constant dense<0.000000e+00> : vector<16x32xf32>
    %7 = tpu.matmul %5, %6, %cst_7 {dimension_numbers = #tpu.dot_dimension_numbers<[1], [0], [0], [1], [0, 0, 1, 1], [], []>} : vector<16x16xf32>, vector<16x32xf32>, vector<16x32xf32> -> vector<16x32xf32>
    %8 = arith.addf %3, %7 : vector<16x32xf32>
    %c1 = arith.constant 1 : index
    %c0_8 = arith.constant 0 : index
    %c0_9 = arith.constant 0 : index
    %9 = vector.load %arg0[%c1, %c0_8, %c0_9] : memref<4x16x16xf32, #tpu.memory_space<vmem>>, vector<1x16x16xf32>
    %10 = vector.shape_cast %9 : vector<1x16x16xf32> to vector<16x16xf32>
    %11 = vector.extract_strided_slice %2 {offsets = [0, 32], sizes = [16, 32], strides = [1, 1]} : vector<16x128xf32> to vector<16x32xf32>
    %cst_10 = arith.constant dense<0.000000e+00> : vector<16x32xf32>
    %12 = tpu.matmul %10, %11, %cst_10 {dimension_numbers = #tpu.dot_dimension_numbers<[1], [0], [0], [1], [0, 0, 1, 1], [], []>} : vector<16x16xf32>, vector<16x32xf32>, vector<16x32xf32> -> vector<16x32xf32>
    %13 = arith.addf %8, %12 : vector<16x32xf32>
    %c2 = arith.constant 2 : index
    %c0_11 = arith.constant 0 : index
    %c0_12 = arith.constant 0 : index
    %14 = vector.load %arg0[%c2, %c0_11, %c0_12] : memref<4x16x16xf32, #tpu.memory_space<vmem>>, vector<1x16x16xf32>
    %15 = vector.shape_cast %14 : vector<1x16x16xf32> to vector<16x16xf32>
    %16 = vector.extract_strided_slice %2 {offsets = [0, 64], sizes = [16, 32], strides = [1, 1]} : vector<16x128xf32> to vector<16x32xf32>
    %cst_13 = arith.constant dense<0.000000e+00> : vector<16x32xf32>
    %17 = tpu.matmul %15, %16, %cst_13 {dimension_numbers = #tpu.dot_dimension_numbers<[1], [0], [0], [1], [0, 0, 1, 1], [], []>} : vector<16x16xf32>, vector<16x32xf32>, vector<16x32xf32> -> vector<16x32xf32>
    %18 = arith.addf %13, %17 : vector<16x32xf32>
    %c3 = arith.constant 3 : index
    %c0_14 = arith.constant 0 : index
    %c0_15 = arith.constant 0 : index
    %19 = vector.load %arg0[%c3, %c0_14, %c0_15] : memref<4x16x16xf32, #tpu.memory_space<vmem>>, vector<1x16x16xf32>
    %20 = vector.shape_cast %19 : vector<1x16x16xf32> to vector<16x16xf32>
    %21 = vector.extract_strided_slice %2 {offsets = [0, 96], sizes = [16, 32], strides = [1, 1]} : vector<16x128xf32> to vector<16x32xf32>
    %cst_16 = arith.constant dense<0.000000e+00> : vector<16x32xf32>
    %22 = tpu.matmul %20, %21, %cst_16 {dimension_numbers = #tpu.dot_dimension_numbers<[1], [0], [0], [1], [0, 0, 1, 1], [], []>} : vector<16x16xf32>, vector<16x32xf32>, vector<16x32xf32> -> vector<16x32xf32>
    %23 = arith.addf %18, %22 : vector<16x32xf32>
    %24 = arith.negf %23 : vector<16x32xf32>
    %25 = math.exp %24 : vector<16x32xf32>
    %cst_17 = arith.constant 1.000000e+00 : f32
    %26 = vector.broadcast %cst_17 : f32 to vector<16x32xf32>
    %27 = arith.addf %26, %25 : vector<16x32xf32>
    %28 = arith.divf %26, %27 : vector<16x32xf32>
    %c0_18 = arith.constant 0 : index
    %c0_19 = arith.constant 0 : index
    %29 = vector.load %arg3[%c0_18, %c0_19] : memref<32x128xf32, #tpu.memory_space<vmem>>, vector<32x128xf32>
    %cst_20 = arith.constant dense<0.000000e+00> : vector<16x128xf32>
    %30 = tpu.matmul %28, %29, %cst_20 {dimension_numbers = #tpu.dot_dimension_numbers<[1], [0], [0], [1], [0, 0, 1, 1], [], []>} : vector<16x32xf32>, vector<32x128xf32>, vector<16x128xf32> -> vector<16x128xf32>
    %cst_21 = arith.constant 0.000000e+00 : f32
    %31 = vector.broadcast %cst_21 : f32 to vector<16x32xf32>
    %c0_22 = arith.constant 0 : index
    %c0_23 = arith.constant 0 : index
    %c0_24 = arith.constant 0 : index
    %32 = vector.load %arg0[%c0_22, %c0_23, %c0_24] : memref<4x16x16xf32, #tpu.memory_space<vmem>>, vector<1x16x16xf32>
    %33 = vector.shape_cast %32 : vector<1x16x16xf32> to vector<16x16xf32>
    %34 = vector.extract_strided_slice %30 {offsets = [0, 0], sizes = [16, 32], strides = [1, 1]} : vector<16x128xf32> to vector<16x32xf32>
    %cst_25 = arith.constant dense<0.000000e+00> : vector<16x32xf32>
    %35 = tpu.matmul %33, %34, %cst_25 {dimension_numbers = #tpu.dot_dimension_numbers<[1], [0], [0], [1], [0, 0, 1, 1], [], []>} : vector<16x16xf32>, vector<16x32xf32>, vector<16x32xf32> -> vector<16x32xf32>
    %36 = arith.addf %31, %35 : vector<16x32xf32>
    %c1_26 = arith.constant 1 : index
    %c0_27 = arith.constant 0 : index
    %c0_28 = arith.constant 0 : index
    %37 = vector.load %arg0[%c1_26, %c0_27, %c0_28] : memref<4x16x16xf32, #tpu.memory_space<vmem>>, vector<1x16x16xf32>
    %38 = vector.shape_cast %37 : vector<1x16x16xf32> to vector<16x16xf32>
    %39 = vector.extract_strided_slice %30 {offsets = [0, 32], sizes = [16, 32], strides = [1, 1]} : vector<16x128xf32> to vector<16x32xf32>
    %cst_29 = arith.constant dense<0.000000e+00> : vector<16x32xf32>
    %40 = tpu.matmul %38, %39, %cst_29 {dimension_numbers = #tpu.dot_dimension_numbers<[1], [0], [0], [1], [0, 0, 1, 1], [], []>} : vector<16x16xf32>, vector<16x32xf32>, vector<16x32xf32> -> vector<16x32xf32>
    %41 = arith.addf %36, %40 : vector<16x32xf32>
    %c2_30 = arith.constant 2 : index
    %c0_31 = arith.constant 0 : index
    %c0_32 = arith.constant 0 : index
    %42 = vector.load %arg0[%c2_30, %c0_31, %c0_32] : memref<4x16x16xf32, #tpu.memory_space<vmem>>, vector<1x16x16xf32>
    %43 = vector.shape_cast %42 : vector<1x16x16xf32> to vector<16x16xf32>
    %44 = vector.extract_strided_slice %30 {offsets = [0, 64], sizes = [16, 32], strides = [1, 1]} : vector<16x128xf32> to vector<16x32xf32>
    %cst_33 = arith.constant dense<0.000000e+00> : vector<16x32xf32>
    %45 = tpu.matmul %43, %44, %cst_33 {dimension_numbers = #tpu.dot_dimension_numbers<[1], [0], [0], [1], [0, 0, 1, 1], [], []>} : vector<16x16xf32>, vector<16x32xf32>, vector<16x32xf32> -> vector<16x32xf32>
    %46 = arith.addf %41, %45 : vector<16x32xf32>
    %c3_34 = arith.constant 3 : index
    %c0_35 = arith.constant 0 : index
    %c0_36 = arith.constant 0 : index
    %47 = vector.load %arg0[%c3_34, %c0_35, %c0_36] : memref<4x16x16xf32, #tpu.memory_space<vmem>>, vector<1x16x16xf32>
    %48 = vector.shape_cast %47 : vector<1x16x16xf32> to vector<16x16xf32>
    %49 = vector.extract_strided_slice %30 {offsets = [0, 96], sizes = [16, 32], strides = [1, 1]} : vector<16x128xf32> to vector<16x32xf32>
    %cst_37 = arith.constant dense<0.000000e+00> : vector<16x32xf32>
    %50 = tpu.matmul %48, %49, %cst_37 {dimension_numbers = #tpu.dot_dimension_numbers<[1], [0], [0], [1], [0, 0, 1, 1], [], []>} : vector<16x16xf32>, vector<16x32xf32>, vector<16x32xf32> -> vector<16x32xf32>
    %51 = arith.addf %46, %50 : vector<16x32xf32>
    %c0_38 = arith.constant 0 : index
    %c0_39 = arith.constant 0 : index
    %52 = vector.load %arg10[%c0_38, %c0_39] : memref<16x64xf32, #tpu.memory_space<vmem>>, vector<16x32xf32>
    tpu.vector_store %arg10[%c0_38, %c0_39], %0 {strides = array<i32>} : memref<16x64xf32, #tpu.memory_space<vmem>>, vector<16x32xf32>,
    %c0_40 = arith.constant 0 : index
    %c32 = arith.constant 32 : index
    %53 = vector.load %arg10[%c0_40, %c32] : memref<16x64xf32, #tpu.memory_space<vmem>>, vector<16x32xf32>
    tpu.vector_store %arg10[%c0_40, %c32], %51 {strides = array<i32>} : memref<16x64xf32, #tpu.memory_space<vmem>>, vector<16x32xf32>,
    %c0_41 = arith.constant 0 : index
    %c0_42 = arith.constant 0 : index
    %54 = vector.load %arg4[%c0_41, %c0_42] : memref<32x32xf32, #tpu.memory_space<vmem>>, vector<32x32xf32>
    %cst_43 = arith.constant dense<0.000000e+00> : vector<16x32xf32>
    %55 = tpu.matmul %0, %54, %cst_43 {dimension_numbers = #tpu.dot_dimension_numbers<[1], [0], [0], [1], [0, 0, 1, 1], [], []>} : vector<16x32xf32>, vector<32x32xf32>, vector<16x32xf32> -> vector<16x32xf32>
    %c0_44 = arith.constant 0 : index
    %c0_45 = arith.constant 0 : index
    %56 = vector.load %arg5[%c0_44, %c0_45] : memref<32x32xf32, #tpu.memory_space<vmem>>, vector<32x32xf32>
    %cst_46 = arith.constant dense<0.000000e+00> : vector<16x32xf32>
    %57 = tpu.matmul %51, %56, %cst_46 {dimension_numbers = #tpu.dot_dimension_numbers<[1], [0], [0], [1], [0, 0, 1, 1], [], []>} : vector<16x32xf32>, vector<32x32xf32>, vector<16x32xf32> -> vector<16x32xf32>
    %58 = arith.addf %55, %57 : vector<16x32xf32>
    %c0_47 = arith.constant 0 : index
    %c0_48 = arith.constant 0 : index
    %59 = vector.load %arg6[%c0_47, %c0_48] : memref<1x32xf32, #tpu.memory_space<vmem>>, vector<1x32xf32>
    %60 = vector.broadcast %59 : vector<1x32xf32> to vector<16x32xf32>
    %61 = arith.addf %58, %60 : vector<16x32xf32>
    %cst_49 = arith.constant 0.000000e+00 : f32
    %62 = vector.broadcast %cst_49 : f32 to vector<16x32xf32>
    %63 = arith.maximumf %61, %62 : vector<16x32xf32>
    %c0_50 = arith.constant 0 : index
    %c0_51 = arith.constant 0 : index
    %64 = vector.load %arg7[%c0_50, %c0_51] : memref<32x128xf32, #tpu.memory_space<vmem>>, vector<32x128xf32>
    %cst_52 = arith.constant dense<0.000000e+00> : vector<16x128xf32>
    %65 = tpu.matmul %63, %64, %cst_52 {dimension_numbers = #tpu.dot_dimension_numbers<[1], [0], [0], [1], [0, 0, 1, 1], [], []>} : vector<16x32xf32>, vector<32x128xf32>, vector<16x128xf32> -> vector<16x128xf32>
    %c0_53 = arith.constant 0 : index
    %c0_54 = arith.constant 0 : index
    %66 = vector.load %arg8[%c0_53, %c0_54] : memref<1x128xf32, #tpu.memory_space<vmem>>, vector<1x128xf32>
    %67 = vector.broadcast %66 : vector<1x128xf32> to vector<16x128xf32>
    %68 = arith.addf %65, %67 : vector<16x128xf32>
    %cst_55 = arith.constant dense<0xFF800000> : vector<16xf32>
    %69 = vector.multi_reduction <maximumf>, %68, %cst_55 [1] : vector<16x128xf32> to vector<16xf32>
    %70 = vector.shape_cast %69 : vector<16xf32> to vector<16x1xf32>
    %71 = vector.broadcast %70 : vector<16x1xf32> to vector<16x128xf32>
    %72 = arith.subf %68, %71 : vector<16x128xf32>
    %73 = math.exp %72 : vector<16x128xf32>
    %cst_56 = arith.constant dense<0.000000e+00> : vector<16xf32>
    %74 = vector.multi_reduction <add>, %73, %cst_56 [1] : vector<16x128xf32> to vector<16xf32>
    %75 = vector.shape_cast %74 : vector<16xf32> to vector<16x1xf32>
    %76 = math.log %75 : vector<16x1xf32>
    %77 = vector.broadcast %76 : vector<16x1xf32> to vector<16x128xf32>
    %78 = arith.subf %72, %77 : vector<16x128xf32>
    %c0_57 = arith.constant 0 : index
    %c0_58 = arith.constant 0 : index
    %79 = vector.load %arg9[%c0_57, %c0_58] : memref<16x128xf32, #tpu.memory_space<vmem>>, vector<16x128xf32>
    tpu.vector_store %arg9[%c0_57, %c0_58], %78 {strides = array<i32>} : memref<16x128xf32, #tpu.memory_space<vmem>>, vector<16x128xf32>,
    return
  }
}

</mosaic_0001>

<llo_original>
// kernel: tpu_custom_call.1
$region0: #{tpu_custom_call.1}
  #allocation0 [shape = 'u32[]', space=smem, size = 0x4, offset = 0x4, fixed_abs, tag = 'smem constant byte address 0x4 - core index']
  #allocation1 [shape = 'u32[144,128]{1,0:T(1,128)}', space=vmem, size = 0x12000, scoped, tag = 'internal scratch']
  %s0 = inlined_call_operand.hbm [shape: f32[4,16,16], index: 0, kind: input, shape index: {}]
  %s1 = inlined_call_operand.hbm [shape: f32[16,32], index: 1, kind: input, shape index: {}]
  %s2 = inlined_call_operand.hbm [shape: f32[32,128], index: 2, kind: input, shape index: {}]
  %s3 = inlined_call_operand.hbm [shape: f32[32,128], index: 3, kind: input, shape index: {}]
  %s4 = inlined_call_operand.hbm [shape: f32[32,32], index: 4, kind: input, shape index: {}]
  %s5 = inlined_call_operand.hbm [shape: f32[32,32], index: 5, kind: input, shape index: {}]
  %s6 = inlined_call_operand.vmem [shape: f32[1,32], index: 6, kind: input, shape index: {}]
  %s7 = inlined_call_operand.hbm [shape: f32[32,128], index: 7, kind: input, shape index: {}]
  %s8 = inlined_call_operand.vmem [shape: f32[1,128], index: 8, kind: input, shape index: {}]
  %s9 = inlined_call_operand.hbm [shape: f32[16,128], index: 9, kind: output, shape index: {0}]
  %s10 = inlined_call_operand.hbm [shape: f32[16,64], index: 10, kind: output, shape index: {1}]
  %11 = xla_tuple %s9, %s10
  %s12 = sld [smem:[#allocation0]]
  $region82: #{tpu_custom_call.1} parent=0
    _
  %s14 = ssub.s32 1, %s12
  %s15 = scalar_select 0, %s14, %s12
  $region1: #{tpu_custom_call.1} parent=0
    #allocation2 [shape = 'u8[32768]{0}', space=vmem, size = 0x8000, scoped, tag = 'input window, operand 0, single buffered']
    #allocation3 [shape = 's32[1]{0}', space=sflag, size = 0x4, scoped, tag = 'scoped memory for tpu_custom_call.1']
    #allocation4 [shape = 's32[1]{0}', space=sflag, size = 0x4, scoped, tag = 'scoped memory for tpu_custom_call.1']
    #allocation5 [shape = 'u8[8192]{0}', space=vmem, size = 0x2000, scoped, tag = 'input window, operand 1, single buffered']
    #allocation6 [shape = 's32[1]{0}', space=sflag, size = 0x4, scoped, tag = 'scoped memory for tpu_custom_call.1']
    #allocation7 [shape = 'u8[16384]{0}', space=vmem, size = 0x4000, scoped, tag = 'input window, operand 2, single buffered']
    #allocation8 [shape = 'u8[16384]{0}', space=vmem, size = 0x4000, scoped, tag = 'input window, operand 3, single buffered']
    #allocation9 [shape = 's32[1]{0}', space=sflag, size = 0x4, scoped, tag = 'scoped memory for tpu_custom_call.1']
    #allocation10 [shape = 'u8[16384]{0}', space=vmem, size = 0x4000, scoped, tag = 'input window, operand 4, single buffered']
    #allocation11 [shape = 'u8[16384]{0}', space=vmem, size = 0x4000, scoped, tag = 'input window, operand 5, single buffered']
    #allocation12 [shape = 's32[1]{0}', space=sflag, size = 0x4, scoped, tag = 'scoped memory for tpu_custom_call.1']
    #allocation13 [shape = 'u8[16384]{0}', space=vmem, size = 0x4000, scoped, tag = 'input window, operand 7, single buffered']
    #allocation14 [shape = 'u8[8192]{0}', space=vmem, size = 0x2000, scoped, tag = 'output window, operand 0, single buffered']
    #allocation15 [shape = 'u8[8192]{0}', space=vmem, size = 0x2000, scoped, tag = 'output window, operand 1, single buffered']
    #allocation16 [shape = 's32[1]{0}', space=sflag, size = 0x4, scoped, tag = 'scoped memory for tpu_custom_call.1']
    %16 = vsyncpa [#allocation3], 0
    %17 = vsyncpa [#allocation6], 0
    %18 = vsyncpa [#allocation9], 0
    %19 = vsyncpa [#allocation12], 0
    %20 = vsyncpa [#allocation4], 0
    %21 = vsyncpa [#allocation16], 0
    // Predicated region
    $region2: #{tpu_custom_call.1} parent=1 // pred_check
      _
    $region3: #{tpu_custom_call.1} parent=1 // pred_check_branch
      %23 = sbr.rel (0) target = $region5
    $region4: #{tpu_custom_call.1} parent=1 // pred_region
      %s25 = ssub.s32 1024, 1024
      %26 = vsyncadd [#allocation3], %s25
      %s27 = sshll.u32 [#allocation2], 4
      %s28 = int_to_ptr.vmem [resolvable:$true] %s27
      %33 = dma.hbm_to_vmem [thread:$0]  %s0, 1024, %s28, [#allocation3], 128, 128, 8
    $region5: #{tpu_custom_call.1} parent=1 // pred_fallthru
      _
    // Predicated region
    $region6: #{tpu_custom_call.1} parent=1 // pred_check
      _
    $region7: #{tpu_custom_call.1} parent=1 // pred_check_branch
      %35 = sbr.rel (0) target = $region9
    $region8: #{tpu_custom_call.1} parent=1 // pred_region
      %s37 = ssub.s32 256, 256
      %38 = vsyncadd [#allocation6], %s37
      %s39 = sshll.u32 [#allocation5], 4
      %s40 = int_to_ptr.vmem [resolvable:$true] %s39
      %45 = dma.hbm_to_vmem [thread:$0]  %s1, 256, %s40, [#allocation6], 128, 128, 8
    $region9: #{tpu_custom_call.1} parent=1 // pred_fallthru
      _
    // Predicated region
    $region10: #{tpu_custom_call.1} parent=1 // pred_check
      _
    $region11: #{tpu_custom_call.1} parent=1 // pred_check_branch
      %47 = sbr.rel (0) target = $region13
    $region12: #{tpu_custom_call.1} parent=1 // pred_region
      %s49 = ssub.s32 512, 512
      %50 = vsyncadd [#allocation6], %s49
      %s51 = sshll.u32 [#allocation7], 4
      %s52 = int_to_ptr.vmem [resolvable:$true] %s51
      %57 = dma.hbm_to_vmem [thread:$0]  %s2, 512, %s52, [#allocation6], 128, 128, 8
    $region13: #{tpu_custom_call.1} parent=1 // pred_fallthru
      _
    // Predicated region
    $region14: #{tpu_custom_call.1} parent=1 // pred_check
      _
    $region15: #{tpu_custom_call.1} parent=1 // pred_check_branch
      %59 = sbr.rel (0) target = $region17
    $region16: #{tpu_custom_call.1} parent=1 // pred_region
      %s61 = ssub.s32 512, 512
      %62 = vsyncadd [#allocation9], %s61
      %s63 = sshll.u32 [#allocation8], 4
      %s64 = int_to_ptr.vmem [resolvable:$true] %s63
      %69 = dma.hbm_to_vmem [thread:$0]  %s3, 512, %s64, [#allocation9], 128, 128, 8
    $region17: #{tpu_custom_call.1} parent=1 // pred_fallthru
      _
    // Predicated region
    $region18: #{tpu_custom_call.1} parent=1 // pred_check
      _
    $region19: #{tpu_custom_call.1} parent=1 // pred_check_branch
      %71 = sbr.rel (0) target = $region21
    $region20: #{tpu_custom_call.1} parent=1 // pred_region
      %s73 = ssub.s32 512, 512
      %74 = vsyncadd [#allocation9], %s73
      %s75 = sshll.u32 [#allocation10], 4
      %s76 = int_to_ptr.vmem [resolvable:$true] %s75
      %81 = dma.hbm_to_vmem [thread:$0]  %s4, 512, %s76, [#allocation9], 128, 128, 8
    $region21: #{tpu_custom_call.1} parent=1 // pred_fallthru
      _
    // Predicated region
    $region22: #{tpu_custom_call.1} parent=1 // pred_check
      _
    $region23: #{tpu_custom_call.1} parent=1 // pred_check_branch
      %83 = sbr.rel (0) target = $region25
    $region24: #{tpu_custom_call.1} parent=1 // pred_region
      %s85 = ssub.s32 512, 512
      %86 = vsyncadd [#allocation12], %s85
      %s87 = sshll.u32 [#allocation11], 4
      %s88 = int_to_ptr.vmem [resolvable:$true] %s87
      %93 = dma.hbm_to_vmem [thread:$0]  %s5, 512, %s88, [#allocation12], 128, 128, 8
    $region25: #{tpu_custom_call.1} parent=1 // pred_fallthru
      _
    // Predicated region
    $region26: #{tpu_custom_call.1} parent=1 // pred_check
      _
    $region27: #{tpu_custom_call.1} parent=1 // pred_check_branch
      %95 = sbr.rel (0) target = $region29
    $region28: #{tpu_custom_call.1} parent=1 // pred_region
      _
    $region29: #{tpu_custom_call.1} parent=1 // pred_fallthru
      _
    // Predicated region
    $region30: #{tpu_custom_call.1} parent=1 // pred_check
      _
    $region31: #{tpu_custom_call.1} parent=1 // pred_check_branch
      %97 = sbr.rel (0) target = $region33
    $region32: #{tpu_custom_call.1} parent=1 // pred_region
      %s99 = ssub.s32 512, 512
      %100 = vsyncadd [#allocation12], %s99
      %s101 = sshll.u32 [#allocation13], 4
      %s102 = int_to_ptr.vmem [resolvable:$true] %s101
      %107 = dma.hbm_to_vmem [thread:$0]  %s7, 512, %s102, [#allocation12], 128, 128, 8
    $region33: #{tpu_custom_call.1} parent=1 // pred_fallthru
      _
    // Predicated region
    $region34: #{tpu_custom_call.1} parent=1 // pred_check
      _
    $region35: #{tpu_custom_call.1} parent=1 // pred_check_branch
      %109 = sbr.rel (0) target = $region37
    $region36: #{tpu_custom_call.1} parent=1 // pred_region
      _
    $region37: #{tpu_custom_call.1} parent=1 // pred_fallthru
      _
    // Predicated region
    $region38: #{tpu_custom_call.1} parent=1 // pred_check
      _
    $region39: #{tpu_custom_call.1} parent=1 // pred_check_branch
      %111 = sbr.rel (0) target = $region41
    $region40: #{tpu_custom_call.1} parent=1 // pred_region
      %112 = dma.done [#allocation3], 1024
    $region41: #{tpu_custom_call.1} parent=1 // pred_fallthru
      _
    // Predicated region
    $region42: #{tpu_custom_call.1} parent=1 // pred_check
      _
    $region43: #{tpu_custom_call.1} parent=1 // pred_check_branch
      %114 = sbr.rel (0) target = $region45
    $region44: #{tpu_custom_call.1} parent=1 // pred_region
      %115 = dma.done [#allocation6], 256
    $region45: #{tpu_custom_call.1} parent=1 // pred_fallthru
      _
    // Predicated region
    $region46: #{tpu_custom_call.1} parent=1 // pred_check
      _
    $region47: #{tpu_custom_call.1} parent=1 // pred_check_branch
      %117 = sbr.rel (0) target = $region49
    $region48: #{tpu_custom_call.1} parent=1 // pred_region
      %118 = dma.done [#allocation6], 512
    $region49: #{tpu_custom_call.1} parent=1 // pred_fallthru
      _
    // Predicated region
    $region50: #{tpu_custom_call.1} parent=1 // pred_check
      _
    $region51: #{tpu_custom_call.1} parent=1 // pred_check_branch
      %120 = sbr.rel (0) target = $region53
    $region52: #{tpu_custom_call.1} parent=1 // pred_region
      %121 = dma.done [#allocation9], 512
    $region53: #{tpu_custom_call.1} parent=1 // pred_fallthru
      _
    // Predicated region
    $region54: #{tpu_custom_call.1} parent=1 // pred_check
      _
    $region55: #{tpu_custom_call.1} parent=1 // pred_check_branch
      %123 = sbr.rel (0) target = $region57
    $region56: #{tpu_custom_call.1} parent=1 // pred_region
      %124 = dma.done [#allocation9], 512
    $region57: #{tpu_custom_call.1} parent=1 // pred_fallthru
      _
    // Predicated region
    $region58: #{tpu_custom_call.1} parent=1 // pred_check
      _
    $region59: #{tpu_custom_call.1} parent=1 // pred_check_branch
      %126 = sbr.rel (0) target = $region61
    $region60: #{tpu_custom_call.1} parent=1 // pred_region
      %127 = dma.done [#allocation12], 512
    $region61: #{tpu_custom_call.1} parent=1 // pred_fallthru
      _
    // Predicated region
    $region62: #{tpu_custom_call.1} parent=1 // pred_check
      _
    $region63: #{tpu_custom_call.1} parent=1 // pred_check_branch
      %129 = sbr.rel (0) target = $region65
    $region64: #{tpu_custom_call.1} parent=1 // pred_region
      %130 = dma.done [#allocation12], 512
    $region65: #{tpu_custom_call.1} parent=1 // pred_fallthru
      _
    %v131 = vld [vmem:[#allocation5] sm:$0xff]
    %v132 = vld [vmem:[#allocation5 + $0x8] sm:$0xff]
    %v133 = vld [vmem:[#allocation7] sm:$0xff]
    %v134 = vld [vmem:[#allocation7 + $0x8] sm:$0xff]
    %v135 = vld [vmem:[#allocation7 + $0x10] sm:$0xff]
    %v136 = vld [vmem:[#allocation7 + $0x18] sm:$0xff]
    %vm137 = vcmask 261120
    %v139 = vsel %vm137, %v131, 0
    %v142 = vsel %vm137, %v132, 0
    %144 = vmatprep.subr.mxu0 0.0
    %145 = vmatpush1.msra.mxu0 %v133
    %146 = vmatprep.subr.mxu0 0.0
    %147 = vmatpush1.msra.mxu0 %v134
    %148 = vmatprep.subr.mxu0 0.0
    %149 = vmatpush1.msra.mxu0 %v135
    %150 = vmatprep.subr.mxu0 0.0
    %151 = vmatpush1.msra.mxu0 %v136
    %152 = vmatprep.subr.mxu0 0.0
    %153 = vmatpush1.msra.mxu0 0.0
    %154 = vmatprep.subr.mxu0 0.0
    %155 = vmatpush1.msra.mxu0 0.0
    %156 = vmatprep.subr.mxu0 0.0
    %157 = vmatpush1.msra.mxu0 0.0
    %158 = vmatprep.subr.mxu0 0.0
    %159 = vmatpush1.msra.mxu0 0.0
    %160 = vmatprep.subr.mxu0 0.0
    %161 = vmatpush1.msra.mxu0 0.0
    %162 = vmatprep.subr.mxu0 0.0
    %163 = vmatpush1.msra.mxu0 0.0
    %164 = vmatprep.subr.mxu0 0.0
    %165 = vmatpush1.msra.mxu0 0.0
    %166 = vmatprep.subr.mxu0 0.0
    %167 = vmatpush1.msra.mxu0 0.0
    %168 = vmatprep.subr.mxu0 0.0
    %169 = vmatpush1.msra.mxu0 0.0
    %170 = vmatprep.subr.mxu0 0.0
    %171 = vmatpush1.msra.mxu0 0.0
    %172 = vmatprep.subr.mxu0 0.0
    %173 = vmatpush1.msra.mxu0 0.0
    %174 = vmatprep.subr.mxu0 0.0
    %175 = vmatpush1.msra.mxu0 0.0
    %176 = vmatprep.subr.mxu0 0.0
    %177 = vmatpush1.msra.mxu0 0.0
    %178 = vmatprep.subr.mxu0 0.0
    %179 = vmatpush1.msra.mxu0 0.0
    %180 = vmatprep.subr.mxu0 0.0
    %181 = vmatpush1.msra.mxu0 0.0
    %182 = vmatprep.subr.mxu0 0.0
    %183 = vmatpush1.msra.mxu0 0.0
    %184 = vmatprep.subr.mxu0 0.0
    %185 = vmatpush1.msra.mxu0 0.0
    %186 = vmatprep.subr.mxu0 0.0
    %187 = vmatpush1.msra.mxu0 0.0
    %188 = vmatprep.subr.mxu0 0.0
    %189 = vmatpush1.msra.mxu0 0.0
    %190 = vmatprep.subr.mxu0 0.0
    %191 = vmatpush1.msra.mxu0 0.0
    %192 = vmatprep.subr.mxu0 0.0
    %193 = vmatpush1.msra.mxu0 0.0
    %194 = vmatprep.subr.mxu0 0.0
    %195 = vmatpush1.msra.mxu0 0.0
    %196 = vmatprep.subr.mxu0 0.0
    %197 = vmatpush1.msra.mxu0 0.0
    %198 = vmatprep.subr.mxu0 0.0
    %199 = vmatpush1.msra.mxu0 0.0
    %200 = vmatprep.subr.mxu0 0.0
    %201 = vmatpush1.msra.mxu0 0.0
    %202 = vmatprep.subr.mxu0 0.0
    %203 = vmatpush1.msra.mxu0 0.0
    %204 = vmatprep.subr.mxu0 0.0
    %205 = vmatpush1.msra.mxu0 0.0
    %206 = vmatprep.subr.mxu0 0.0
    %207 = vmatpush1.msra.mxu0 0.0
    %208 = vmatprep.mubr.f32.mxu0 0.0
    %209 = vmatmul.mubr.f32.gmra.mrb[0].mxu0 %v139
    %v210 = vpop.f32.mrb[0].mxu0
    %v211 = vadd.f32 0.0, %v210
    %v212 = vpop.f32.mrb[0].mxu0
    %213 = vmatprep.mubr.f32.mxu0 0.0
    %214 = vmatmul.mubr.f32.gmra.mrb[0].mxu0 %v142
    %v215 = vpop.f32.mrb[0].mxu0
    %v216 = vadd.f32 0.0, %v215
    %v217 = vpop.f32.mrb[0].mxu0
    %218 = vdwg.mxu0
    %v219 = vld [vmem:[#allocation2] sm:$0xff]
    %v220 = vld [vmem:[#allocation2 + $0x8] sm:$0xff]
    %s221 = scalar_lea.vmem [#allocation2], 16
    %v222 = vld [vmem:[%s221] sm:$0xff]
    %v223 = vld [vmem:[%s221 + $0x8] sm:$0xff]
    %226 = vrot.lane.b32.xlu0 %v211, 96
    %v227 = vpop.permute.xlu0 %226
    %228 = vrot.lane.b32.xlu0 %v216, 96
    %v229 = vpop.permute.xlu0 %228
    %vm232 = vcmask 130048
    %v234 = vsel %vm232, %v222, 0
    %v237 = vsel %vm232, %v223, 0
    %239 = vmatprep.subr.mxu0 0.0
    %240 = vmatpush1.msra.mxu0 %v227
    %241 = vmatprep.subr.mxu0 0.0
    %242 = vmatpush1.msra.mxu0 %v229
    %243 = vmatprep.subr.mxu0 0.0
    %244 = vmatpush1.msra.mxu0 0.0
    %245 = vmatprep.subr.mxu0 0.0
    %246 = vmatpush1.msra.mxu0 0.0
    %247 = vmatprep.subr.mxu0 0.0
    %248 = vmatpush1.msra.mxu0 0.0
    %249 = vmatprep.subr.mxu0 0.0
    %250 = vmatpush1.msra.mxu0 0.0
    %251 = vmatprep.subr.mxu0 0.0
    %252 = vmatpush1.msra.mxu0 0.0
    %253 = vmatprep.subr.mxu0 0.0
    %254 = vmatpush1.msra.mxu0 0.0
    %255 = vmatprep.subr.mxu0 0.0
    %256 = vmatpush1.msra.mxu0 0.0
    %257 = vmatprep.subr.mxu0 0.0
    %258 = vmatpush1.msra.mxu0 0.0
    %259 = vmatprep.subr.mxu0 0.0
    %260 = vmatpush1.msra.mxu0 0.0
    %261 = vmatprep.subr.mxu0 0.0
    %262 = vmatpush1.msra.mxu0 0.0
    %263 = vmatprep.subr.mxu0 0.0
    %264 = vmatpush1.msra.mxu0 0.0
    %265 = vmatprep.subr.mxu0 0.0
    %266 = vmatpush1.msra.mxu0 0.0
    %267 = vmatprep.subr.mxu0 0.0
    %268 = vmatpush1.msra.mxu0 0.0
    %269 = vmatprep.subr.mxu0 0.0
    %270 = vmatpush1.msra.mxu0 0.0
    %271 = vmatprep.subr.mxu0 0.0
    %272 = vmatpush1.msra.mxu0 0.0
    %273 = vmatprep.subr.mxu0 0.0
    %274 = vmatpush1.msra.mxu0 0.0
    %275 = vmatprep.subr.mxu0 0.0
    %276 = vmatpush1.msra.mxu0 0.0
    %277 = vmatprep.subr.mxu0 0.0
    %278 = vmatpush1.msra.mxu0 0.0
    %279 = vmatprep.subr.mxu0 0.0
    %280 = vmatpush1.msra.mxu0 0.0
    %281 = vmatprep.subr.mxu0 0.0
    %282 = vmatpush1.msra.mxu0 0.0
    %283 = vmatprep.subr.mxu0 0.0
    %284 = vmatpush1.msra.mxu0 0.0
    %285 = vmatprep.subr.mxu0 0.0
    %286 = vmatpush1.msra.mxu0 0.0
    %287 = vmatprep.subr.mxu0 0.0
    %288 = vmatpush1.msra.mxu0 0.0
    %289 = vmatprep.subr.mxu0 0.0
    %290 = vmatpush1.msra.mxu0 0.0
    %291 = vmatprep.subr.mxu0 0.0
    %292 = vmatpush1.msra.mxu0 0.0
    %293 = vmatprep.subr.mxu0 0.0
    %294 = vmatpush1.msra.mxu0 0.0
    %295 = vmatprep.subr.mxu0 0.0
    %296 = vmatpush1.msra.mxu0 0.0
    %297 = vmatprep.subr.mxu0 0.0
    %298 = vmatpush1.msra.mxu0 0.0
    %299 = vmatprep.subr.mxu0 0.0
    %300 = vmatpush1.msra.mxu0 0.0
    %301 = vmatprep.subr.mxu0 0.0
    %302 = vmatpush1.msra.mxu0 0.0
    %303 = vmatprep.mubr.f32.mxu0 0.0
    %304 = vmatmul.mubr.f32.gmra.mrb[0].mxu0 %v234
    %v305 = vpop.f32.mrb[0].mxu0
    %v306 = vadd.f32 0.0, %v305
    %v307 = vpop.f32.mrb[0].mxu0
    %308 = vmatprep.mubr.f32.mxu0 0.0
    %309 = vmatmul.mubr.f32.gmra.mrb[0].mxu0 %v237
    %v310 = vpop.f32.mrb[0].mxu0
    %v311 = vadd.f32 0.0, %v310
    %v312 = vpop.f32.mrb[0].mxu0
    %313 = vdwg.mxu0
    %v315 = vsel %vm232, %v219, 0
    %v318 = vsel %vm232, %v220, 0
    %320 = vmatprep.subr.mxu0 0.0
    %321 = vmatpush1.msra.mxu0 %v211
    %322 = vmatprep.subr.mxu0 0.0
    %323 = vmatpush1.msra.mxu0 %v216
    %324 = vmatprep.subr.mxu0 0.0
    %325 = vmatpush1.msra.mxu0 0.0
    %326 = vmatprep.subr.mxu0 0.0
    %327 = vmatpush1.msra.mxu0 0.0
    %328 = vmatprep.subr.mxu0 0.0
    %329 = vmatpush1.msra.mxu0 0.0
    %330 = vmatprep.subr.mxu0 0.0
    %331 = vmatpush1.msra.mxu0 0.0
    %332 = vmatprep.subr.mxu0 0.0
    %333 = vmatpush1.msra.mxu0 0.0
    %334 = vmatprep.subr.mxu0 0.0
    %335 = vmatpush1.msra.mxu0 0.0
    %336 = vmatprep.subr.mxu0 0.0
    %337 = vmatpush1.msra.mxu0 0.0
    %338 = vmatprep.subr.mxu0 0.0
    %339 = vmatpush1.msra.mxu0 0.0
    %340 = vmatprep.subr.mxu0 0.0
    %341 = vmatpush1.msra.mxu0 0.0
    %342 = vmatprep.subr.mxu0 0.0
    %343 = vmatpush1.msra.mxu0 0.0
    %344 = vmatprep.subr.mxu0 0.0
    %345 = vmatpush1.msra.mxu0 0.0
    %346 = vmatprep.subr.mxu0 0.0
    %347 = vmatpush1.msra.mxu0 0.0
    %348 = vmatprep.subr.mxu0 0.0
    %349 = vmatpush1.msra.mxu0 0.0
    %350 = vmatprep.subr.mxu0 0.0
    %351 = vmatpush1.msra.mxu0 0.0
    %352 = vmatprep.subr.mxu0 0.0
    %353 = vmatpush1.msra.mxu0 0.0
    %354 = vmatprep.subr.mxu0 0.0
    %355 = vmatpush1.msra.mxu0 0.0
    %356 = vmatprep.subr.mxu0 0.0
    %357 = vmatpush1.msra.mxu0 0.0
    %358 = vmatprep.subr.mxu0 0.0
    %359 = vmatpush1.msra.mxu0 0.0
    %360 = vmatprep.subr.mxu0 0.0
    %361 = vmatpush1.msra.mxu0 0.0
    %362 = vmatprep.subr.mxu0 0.0
    %363 = vmatpush1.msra.mxu0 0.0
    %364 = vmatprep.subr.mxu0 0.0
    %365 = vmatpush1.msra.mxu0 0.0
    %366 = vmatprep.subr.mxu0 0.0
    %367 = vmatpush1.msra.mxu0 0.0
    %368 = vmatprep.subr.mxu0 0.0
    %369 = vmatpush1.msra.mxu0 0.0
    %370 = vmatprep.subr.mxu0 0.0
    %371 = vmatpush1.msra.mxu0 0.0
    %372 = vmatprep.subr.mxu0 0.0
    %373 = vmatpush1.msra.mxu0 0.0
    %374 = vmatprep.subr.mxu0 0.0
    %375 = vmatpush1.msra.mxu0 0.0
    %376 = vmatprep.subr.mxu0 0.0
    %377 = vmatpush1.msra.mxu0 0.0
    %378 = vmatprep.subr.mxu0 0.0
    %379 = vmatpush1.msra.mxu0 0.0
    %380 = vmatprep.subr.mxu0 0.0
    %381 = vmatpush1.msra.mxu0 0.0
    %382 = vmatprep.subr.mxu0 0.0
    %383 = vmatpush1.msra.mxu0 0.0
    %384 = vmatprep.mubr.f32.mxu0 0.0
    %385 = vmatmul.mubr.f32.gmra.mrb[0].mxu0 %v315
    %v386 = vpop.f32.mrb[0].mxu0
    %v387 = vadd.f32 %v306, %v386
    %v388 = vpop.f32.mrb[0].mxu0
    %389 = vmatprep.mubr.f32.mxu0 0.0
    %390 = vmatmul.mubr.f32.gmra.mrb[0].mxu0 %v318
    %v391 = vpop.f32.mrb[0].mxu0
    %v392 = vadd.f32 %v311, %v391
    %v393 = vpop.f32.mrb[0].mxu0
    %394 = vdwg.mxu0
    %s395 = scalar_lea.vmem [#allocation2], 32
    %v396 = vld [vmem:[%s395] sm:$0xff]
    %v397 = vld [vmem:[%s395 + $0x8] sm:$0xff]
    %398 = vrot.lane.b32.xlu0 %v211, 64
    %v399 = vpop.permute.xlu0 %398
    %400 = vrot.lane.b32.xlu0 %v216, 64
    %v401 = vpop.permute.xlu0 %400
    %v405 = vsel %vm232, %v396, 0
    %v408 = vsel %vm232, %v397, 0
    %410 = vmatprep.subr.mxu0 0.0
    %411 = vmatpush1.msra.mxu0 %v399
    %412 = vmatprep.subr.mxu0 0.0
    %413 = vmatpush1.msra.mxu0 %v401
    %414 = vmatprep.subr.mxu0 0.0
    %415 = vmatpush1.msra.mxu0 0.0
    %416 = vmatprep.subr.mxu0 0.0
    %417 = vmatpush1.msra.mxu0 0.0
    %418 = vmatprep.subr.mxu0 0.0
    %419 = vmatpush1.msra.mxu0 0.0
    %420 = vmatprep.subr.mxu0 0.0
    %421 = vmatpush1.msra.mxu0 0.0
    %422 = vmatprep.subr.mxu0 0.0
    %423 = vmatpush1.msra.mxu0 0.0
    %424 = vmatprep.subr.mxu0 0.0
    %425 = vmatpush1.msra.mxu0 0.0
    %426 = vmatprep.subr.mxu0 0.0
    %427 = vmatpush1.msra.mxu0 0.0
    %428 = vmatprep.subr.mxu0 0.0
    %429 = vmatpush1.msra.mxu0 0.0
    %430 = vmatprep.subr.mxu0 0.0
    %431 = vmatpush1.msra.mxu0 0.0
    %432 = vmatprep.subr.mxu0 0.0
    %433 = vmatpush1.msra.mxu0 0.0
    %434 = vmatprep.subr.mxu0 0.0
    %435 = vmatpush1.msra.mxu0 0.0
    %436 = vmatprep.subr.mxu0 0.0
    %437 = vmatpush1.msra.mxu0 0.0
    %438 = vmatprep.subr.mxu0 0.0
    %439 = vmatpush1.msra.mxu0 0.0
    %440 = vmatprep.subr.mxu0 0.0
    %441 = vmatpush1.msra.mxu0 0.0
    %442 = vmatprep.subr.mxu0 0.0
    %443 = vmatpush1.msra.mxu0 0.0
    %444 = vmatprep.subr.mxu0 0.0
    %445 = vmatpush1.msra.mxu0 0.0
    %446 = vmatprep.subr.mxu0 0.0
    %447 = vmatpush1.msra.mxu0 0.0
    %448 = vmatprep.subr.mxu0 0.0
    %449 = vmatpush1.msra.mxu0 0.0
    %450 = vmatprep.subr.mxu0 0.0
    %451 = vmatpush1.msra.mxu0 0.0
    %452 = vmatprep.subr.mxu0 0.0
    %453 = vmatpush1.msra.mxu0 0.0
    %454 = vmatprep.subr.mxu0 0.0
    %455 = vmatpush1.msra.mxu0 0.0
    %456 = vmatprep.subr.mxu0 0.0
    %457 = vmatpush1.msra.mxu0 0.0
    %458 = vmatprep.subr.mxu0 0.0
    %459 = vmatpush1.msra.mxu0 0.0
    %460 = vmatprep.subr.mxu0 0.0
    %461 = vmatpush1.msra.mxu0 0.0
    %462 = vmatprep.subr.mxu0 0.0
    %463 = vmatpush1.msra.mxu0 0.0
    %464 = vmatprep.subr.mxu0 0.0
    %465 = vmatpush1.msra.mxu0 0.0
    %466 = vmatprep.subr.mxu0 0.0
    %467 = vmatpush1.msra.mxu0 0.0
    %468 = vmatprep.subr.mxu0 0.0
    %469 = vmatpush1.msra.mxu0 0.0
    %470 = vmatprep.subr.mxu0 0.0
    %471 = vmatpush1.msra.mxu0 0.0
    %472 = vmatprep.subr.mxu0 0.0
    %473 = vmatpush1.msra.mxu0 0.0
    %474 = vmatprep.mubr.f32.mxu0 0.0
    %475 = vmatmul.mubr.f32.gmra.mrb[0].mxu0 %v405
    %v476 = vpop.f32.mrb[0].mxu0
    %v477 = vadd.f32 0.0, %v476
    %v478 = vpop.f32.mrb[0].mxu0
    %479 = vmatprep.mubr.f32.mxu0 0.0
    %480 = vmatmul.mubr.f32.gmra.mrb[0].mxu0 %v408
    %v481 = vpop.f32.mrb[0].mxu0
    %v482 = vadd.f32 0.0, %v481
    %v483 = vpop.f32.mrb[0].mxu0
    %484 = vdwg.mxu0
    %v485 = vadd.f32 %v387, %v477
    %v486 = vadd.f32 %v392, %v482
    %s487 = scalar_lea.vmem [#allocation2], 48
    %v488 = vld [vmem:[%s487] sm:$0xff]
    %v489 = vld [vmem:[%s487 + $0x8] sm:$0xff]
    %490 = vrot.lane.b32.xlu0 %v211, 32
    %v491 = vpop.permute.xlu0 %490
    %492 = vrot.lane.b32.xlu0 %v216, 32
    %v493 = vpop.permute.xlu0 %492
    %v497 = vsel %vm232, %v488, 0
    %v500 = vsel %vm232, %v489, 0
    %502 = vmatprep.subr.mxu0 0.0
    %503 = vmatpush1.msra.mxu0 %v491
    %504 = vmatprep.subr.mxu0 0.0
    %505 = vmatpush1.msra.mxu0 %v493
    %506 = vmatprep.subr.mxu0 0.0
    %507 = vmatpush1.msra.mxu0 0.0
    %508 = vmatprep.subr.mxu0 0.0
    %509 = vmatpush1.msra.mxu0 0.0
    %510 = vmatprep.subr.mxu0 0.0
    %511 = vmatpush1.msra.mxu0 0.0
    %512 = vmatprep.subr.mxu0 0.0
    %513 = vmatpush1.msra.mxu0 0.0
    %514 = vmatprep.subr.mxu0 0.0
    %515 = vmatpush1.msra.mxu0 0.0
    %516 = vmatprep.subr.mxu0 0.0
    %517 = vmatpush1.msra.mxu0 0.0
    %518 = vmatprep.subr.mxu0 0.0
    %519 = vmatpush1.msra.mxu0 0.0
    %520 = vmatprep.subr.mxu0 0.0
    %521 = vmatpush1.msra.mxu0 0.0
    %522 = vmatprep.subr.mxu0 0.0
    %523 = vmatpush1.msra.mxu0 0.0
    %524 = vmatprep.subr.mxu0 0.0
    %525 = vmatpush1.msra.mxu0 0.0
    %526 = vmatprep.subr.mxu0 0.0
    %527 = vmatpush1.msra.mxu0 0.0
    %528 = vmatprep.subr.mxu0 0.0
    %529 = vmatpush1.msra.mxu0 0.0
    %530 = vmatprep.subr.mxu0 0.0
    %531 = vmatpush1.msra.mxu0 0.0
    %532 = vmatprep.subr.mxu0 0.0
    %533 = vmatpush1.msra.mxu0 0.0
    %534 = vmatprep.subr.mxu0 0.0
    %535 = vmatpush1.msra.mxu0 0.0
    %536 = vmatprep.subr.mxu0 0.0
    %537 = vmatpush1.msra.mxu0 0.0
    %538 = vmatprep.subr.mxu0 0.0
    %539 = vmatpush1.msra.mxu0 0.0
    %540 = vmatprep.subr.mxu0 0.0
    %541 = vmatpush1.msra.mxu0 0.0
    %542 = vmatprep.subr.mxu0 0.0
    %543 = vmatpush1.msra.mxu0 0.0
    %544 = vmatprep.subr.mxu0 0.0
    %545 = vmatpush1.msra.mxu0 0.0
    %546 = vmatprep.subr.mxu0 0.0
    %547 = vmatpush1.msra.mxu0 0.0
    %548 = vmatprep.subr.mxu0 0.0
    %549 = vmatpush1.msra.mxu0 0.0
    %550 = vmatprep.subr.mxu0 0.0
    %551 = vmatpush1.msra.mxu0 0.0
    %552 = vmatprep.subr.mxu0 0.0
    %553 = vmatpush1.msra.mxu0 0.0
    %554 = vmatprep.subr.mxu0 0.0
    %555 = vmatpush1.msra.mxu0 0.0
    %556 = vmatprep.subr.mxu0 0.0
    %557 = vmatpush1.msra.mxu0 0.0
    %558 = vmatprep.subr.mxu0 0.0
    %559 = vmatpush1.msra.mxu0 0.0
    %560 = vmatprep.subr.mxu0 0.0
    %561 = vmatpush1.msra.mxu0 0.0
    %562 = vmatprep.subr.mxu0 0.0
    %563 = vmatpush1.msra.mxu0 0.0
    %564 = vmatprep.subr.mxu0 0.0
    %565 = vmatpush1.msra.mxu0 0.0
    %566 = vmatprep.mubr.f32.mxu0 0.0
    %567 = vmatmul.mubr.f32.gmra.mrb[0].mxu0 %v497
    %v568 = vpop.f32.mrb[0].mxu0
    %v569 = vadd.f32 0.0, %v568
    %v570 = vpop.f32.mrb[0].mxu0
    %571 = vmatprep.mubr.f32.mxu0 0.0
    %572 = vmatmul.mubr.f32.gmra.mrb[0].mxu0 %v500
    %v573 = vpop.f32.mrb[0].mxu0
    %v574 = vadd.f32 0.0, %v573
    %v575 = vpop.f32.mrb[0].mxu0
    %576 = vdwg.mxu0
    %v577 = vadd.f32 %v485, %v569
    %v578 = vadd.f32 %v486, %v574
    %v579 = vxor.u32 %v577, 2147483648
    %v580 = vxor.u32 %v578, 2147483648
    %v581 = vmul.f32 %v579, 1.442695
    %v582 = vpow.pop %v581
    %v583 = vmul.f32 %v580, 1.442695
    %v584 = vpow.pop %v583
    %v585 = vadd.f32 %v582, 1.0
    %v586 = vadd.f32 %v584, 1.0
    %v587 = vrcp.pop %v585
    %v588 = vmul.f32 1.0, %v587
    %v589 = vrcp.pop %v586
    %v590 = vmul.f32 1.0, %v589
    %v591 = vld [vmem:[#allocation8] sm:$0xff]
    %v592 = vld [vmem:[#allocation8 + $0x8] sm:$0xff]
    %v593 = vld [vmem:[#allocation8 + $0x10] sm:$0xff]
    %v594 = vld [vmem:[#allocation8 + $0x18] sm:$0xff]
    %v596 = vsel %vm137, %v588, 0
    %v599 = vsel %vm137, %v590, 0
    %601 = vmatprep.subr.mxu0 0.0
    %602 = vmatpush1.msra.mxu0 %v591
    %603 = vmatprep.subr.mxu0 0.0
    %604 = vmatpush1.msra.mxu0 %v592
    %605 = vmatprep.subr.mxu0 0.0
    %606 = vmatpush1.msra.mxu0 %v593
    %607 = vmatprep.subr.mxu0 0.0
    %608 = vmatpush1.msra.mxu0 %v594
    %609 = vmatprep.subr.mxu0 0.0
    %610 = vmatpush1.msra.mxu0 0.0
    %611 = vmatprep.subr.mxu0 0.0
    %612 = vmatpush1.msra.mxu0 0.0
    %613 = vmatprep.subr.mxu0 0.0
    %614 = vmatpush1.msra.mxu0 0.0
    %615 = vmatprep.subr.mxu0 0.0
    %616 = vmatpush1.msra.mxu0 0.0
    %617 = vmatprep.subr.mxu0 0.0
    %618 = vmatpush1.msra.mxu0 0.0
    %619 = vmatprep.subr.mxu0 0.0
    %620 = vmatpush1.msra.mxu0 0.0
    %621 = vmatprep.subr.mxu0 0.0
    %622 = vmatpush1.msra.mxu0 0.0
    %623 = vmatprep.subr.mxu0 0.0
    %624 = vmatpush1.msra.mxu0 0.0
    %625 = vmatprep.subr.mxu0 0.0
    %626 = vmatpush1.msra.mxu0 0.0
    %627 = vmatprep.subr.mxu0 0.0
    %628 = vmatpush1.msra.mxu0 0.0
    %629 = vmatprep.subr.mxu0 0.0
    %630 = vmatpush1.msra.mxu0 0.0
    %631 = vmatprep.subr.mxu0 0.0
    %632 = vmatpush1.msra.mxu0 0.0
    %633 = vmatprep.subr.mxu0 0.0
    %634 = vmatpush1.msra.mxu0 0.0
    %635 = vmatprep.subr.mxu0 0.0
    %636 = vmatpush1.msra.mxu0 0.0
    %637 = vmatprep.subr.mxu0 0.0
    %638 = vmatpush1.msra.mxu0 0.0
    %639 = vmatprep.subr.mxu0 0.0
    %640 = vmatpush1.msra.mxu0 0.0
    %641 = vmatprep.subr.mxu0 0.0
    %642 = vmatpush1.msra.mxu0 0.0
    %643 = vmatprep.subr.mxu0 0.0
    %644 = vmatpush1.msra.mxu0 0.0
    %645 = vmatprep.subr.mxu0 0.0
    %646 = vmatpush1.msra.mxu0 0.0
    %647 = vmatprep.subr.mxu0 0.0
    %648 = vmatpush1.msra.mxu0 0.0
    %649 = vmatprep.subr.mxu0 0.0
    %650 = vmatpush1.msra.mxu0 0.0
    %651 = vmatprep.subr.mxu0 0.0
    %652 = vmatpush1.msra.mxu0 0.0
    %653 = vmatprep.subr.mxu0 0.0
    %654 = vmatpush1.msra.mxu0 0.0
    %655 = vmatprep.subr.mxu0 0.0
    %656 = vmatpush1.msra.mxu0 0.0
    %657 = vmatprep.subr.mxu0 0.0
    %658 = vmatpush1.msra.mxu0 0.0
    %659 = vmatprep.subr.mxu0 0.0
    %660 = vmatpush1.msra.mxu0 0.0
    %661 = vmatprep.subr.mxu0 0.0
    %662 = vmatpush1.msra.mxu0 0.0
    %663 = vmatprep.subr.mxu0 0.0
    %664 = vmatpush1.msra.mxu0 0.0
    %665 = vmatprep.mubr.f32.mxu0 0.0
    %666 = vmatmul.mubr.f32.gmra.mrb[0].mxu0 %v596
    %v667 = vpop.f32.mrb[0].mxu0
    %v668 = vadd.f32 0.0, %v667
    %v669 = vpop.f32.mrb[0].mxu0
    %670 = vmatprep.mubr.f32.mxu0 0.0
    %671 = vmatmul.mubr.f32.gmra.mrb[0].mxu0 %v599
    %v672 = vpop.f32.mrb[0].mxu0
    %v673 = vadd.f32 0.0, %v672
    %v674 = vpop.f32.mrb[0].mxu0
    %675 = vdwg.mxu0
    %678 = vrot.lane.b32.xlu0 %v668, 96
    %v679 = vpop.permute.xlu0 %678
    %680 = vrot.lane.b32.xlu0 %v673, 96
    %v681 = vpop.permute.xlu0 %680
    %684 = vmatprep.subr.mxu0 0.0
    %685 = vmatpush1.msra.mxu0 %v679
    %686 = vmatprep.subr.mxu0 0.0
    %687 = vmatpush1.msra.mxu0 %v681
    %688 = vmatprep.subr.mxu0 0.0
    %689 = vmatpush1.msra.mxu0 0.0
    %690 = vmatprep.subr.mxu0 0.0
    %691 = vmatpush1.msra.mxu0 0.0
    %692 = vmatprep.subr.mxu0 0.0
    %693 = vmatpush1.msra.mxu0 0.0
    %694 = vmatprep.subr.mxu0 0.0
    %695 = vmatpush1.msra.mxu0 0.0
    %696 = vmatprep.subr.mxu0 0.0
    %697 = vmatpush1.msra.mxu0 0.0
    %698 = vmatprep.subr.mxu0 0.0
    %699 = vmatpush1.msra.mxu0 0.0
    %700 = vmatprep.subr.mxu0 0.0
    %701 = vmatpush1.msra.mxu0 0.0
    %702 = vmatprep.subr.mxu0 0.0
    %703 = vmatpush1.msra.mxu0 0.0
    %704 = vmatprep.subr.mxu0 0.0
    %705 = vmatpush1.msra.mxu0 0.0
    %706 = vmatprep.subr.mxu0 0.0
    %707 = vmatpush1.msra.mxu0 0.0
    %708 = vmatprep.subr.mxu0 0.0
    %709 = vmatpush1.msra.mxu0 0.0
    %710 = vmatprep.subr.mxu0 0.0
    %711 = vmatpush1.msra.mxu0 0.0
    %712 = vmatprep.subr.mxu0 0.0
    %713 = vmatpush1.msra.mxu0 0.0
    %714 = vmatprep.subr.mxu0 0.0
    %715 = vmatpush1.msra.mxu0 0.0
    %716 = vmatprep.subr.mxu0 0.0
    %717 = vmatpush1.msra.mxu0 0.0
    %718 = vmatprep.subr.mxu0 0.0
    %719 = vmatpush1.msra.mxu0 0.0
    %720 = vmatprep.subr.mxu0 0.0
    %721 = vmatpush1.msra.mxu0 0.0
    %722 = vmatprep.subr.mxu0 0.0
    %723 = vmatpush1.msra.mxu0 0.0
    %724 = vmatprep.subr.mxu0 0.0
    %725 = vmatpush1.msra.mxu0 0.0
    %726 = vmatprep.subr.mxu0 0.0
    %727 = vmatpush1.msra.mxu0 0.0
    %728 = vmatprep.subr.mxu0 0.0
    %729 = vmatpush1.msra.mxu0 0.0
    %730 = vmatprep.subr.mxu0 0.0
    %731 = vmatpush1.msra.mxu0 0.0
    %732 = vmatprep.subr.mxu0 0.0
    %733 = vmatpush1.msra.mxu0 0.0
    %734 = vmatprep.subr.mxu0 0.0
    %735 = vmatpush1.msra.mxu0 0.0
    %736 = vmatprep.subr.mxu0 0.0
    %737 = vmatpush1.msra.mxu0 0.0
    %738 = vmatprep.subr.mxu0 0.0
    %739 = vmatpush1.msra.mxu0 0.0
    %740 = vmatprep.subr.mxu0 0.0
    %741 = vmatpush1.msra.mxu0 0.0
    %742 = vmatprep.subr.mxu0 0.0
    %743 = vmatpush1.msra.mxu0 0.0
    %744 = vmatprep.subr.mxu0 0.0
    %745 = vmatpush1.msra.mxu0 0.0
    %746 = vmatprep.subr.mxu0 0.0
    %747 = vmatpush1.msra.mxu0 0.0
    %748 = vmatprep.mubr.f32.mxu0 0.0
    %749 = vmatmul.mubr.f32.gmra.mrb[0].mxu0 %v234
    %v750 = vpop.f32.mrb[0].mxu0
    %v751 = vadd.f32 0.0, %v750
    %v752 = vpop.f32.mrb[0].mxu0
    %753 = vmatprep.mubr.f32.mxu0 0.0
    %754 = vmatmul.mubr.f32.gmra.mrb[0].mxu0 %v237
    %v755 = vpop.f32.mrb[0].mxu0
    %v756 = vadd.f32 0.0, %v755
    %v757 = vpop.f32.mrb[0].mxu0
    %758 = vdwg.mxu0
    %759 = vmatprep.subr.mxu0 0.0
    %760 = vmatpush1.msra.mxu0 %v668
    %761 = vmatprep.subr.mxu0 0.0
    %762 = vmatpush1.msra.mxu0 %v673
    %763 = vmatprep.subr.mxu0 0.0
    %764 = vmatpush1.msra.mxu0 0.0
    %765 = vmatprep.subr.mxu0 0.0
    %766 = vmatpush1.msra.mxu0 0.0
    %767 = vmatprep.subr.mxu0 0.0
    %768 = vmatpush1.msra.mxu0 0.0
    %769 = vmatprep.subr.mxu0 0.0
    %770 = vmatpush1.msra.mxu0 0.0
    %771 = vmatprep.subr.mxu0 0.0
    %772 = vmatpush1.msra.mxu0 0.0
    %773 = vmatprep.subr.mxu0 0.0
    %774 = vmatpush1.msra.mxu0 0.0
    %775 = vmatprep.subr.mxu0 0.0
    %776 = vmatpush1.msra.mxu0 0.0
    %777 = vmatprep.subr.mxu0 0.0
    %778 = vmatpush1.msra.mxu0 0.0
    %779 = vmatprep.subr.mxu0 0.0
    %780 = vmatpush1.msra.mxu0 0.0
    %781 = vmatprep.subr.mxu0 0.0
    %782 = vmatpush1.msra.mxu0 0.0
    %783 = vmatprep.subr.mxu0 0.0
    %784 = vmatpush1.msra.mxu0 0.0
    %785 = vmatprep.subr.mxu0 0.0
    %786 = vmatpush1.msra.mxu0 0.0
    %787 = vmatprep.subr.mxu0 0.0
    %788 = vmatpush1.msra.mxu0 0.0
    %789 = vmatprep.subr.mxu0 0.0
    %790 = vmatpush1.msra.mxu0 0.0
    %791 = vmatprep.subr.mxu0 0.0
    %792 = vmatpush1.msra.mxu0 0.0
    %793 = vmatprep.subr.mxu0 0.0
    %794 = vmatpush1.msra.mxu0 0.0
    %795 = vmatprep.subr.mxu0 0.0
    %796 = vmatpush1.msra.mxu0 0.0
    %797 = vmatprep.subr.mxu0 0.0
    %798 = vmatpush1.msra.mxu0 0.0
    %799 = vmatprep.subr.mxu0 0.0
    %800 = vmatpush1.msra.mxu0 0.0
    %801 = vmatprep.subr.mxu0 0.0
    %802 = vmatpush1.msra.mxu0 0.0
    %803 = vmatprep.subr.mxu0 0.0
    %804 = vmatpush1.msra.mxu0 0.0
    %805 = vmatprep.subr.mxu0 0.0
    %806 = vmatpush1.msra.mxu0 0.0
    %807 = vmatprep.subr.mxu0 0.0
    %808 = vmatpush1.msra.mxu0 0.0
    %809 = vmatprep.subr.mxu0 0.0
    %810 = vmatpush1.msra.mxu0 0.0
    %811 = vmatprep.subr.mxu0 0.0
    %812 = vmatpush1.msra.mxu0 0.0
    %813 = vmatprep.subr.mxu0 0.0
    %814 = vmatpush1.msra.mxu0 0.0
    %815 = vmatprep.subr.mxu0 0.0
    %816 = vmatpush1.msra.mxu0 0.0
    %817 = vmatprep.subr.mxu0 0.0
    %818 = vmatpush1.msra.mxu0 0.0
    %819 = vmatprep.subr.mxu0 0.0
    %820 = vmatpush1.msra.mxu0 0.0
    %821 = vmatprep.subr.mxu0 0.0
    %822 = vmatpush1.msra.mxu0 0.0
    %823 = vmatprep.mubr.f32.mxu0 0.0
    %824 = vmatmul.mubr.f32.gmra.mrb[0].mxu0 %v315
    %v825 = vpop.f32.mrb[0].mxu0
    %v826 = vadd.f32 %v751, %v825
    %v827 = vpop.f32.mrb[0].mxu0
    %828 = vmatprep.mubr.f32.mxu0 0.0
    %829 = vmatmul.mubr.f32.gmra.mrb[0].mxu0 %v318
    %v830 = vpop.f32.mrb[0].mxu0
    %v831 = vadd.f32 %v756, %v830
    %v832 = vpop.f32.mrb[0].mxu0
    %833 = vdwg.mxu0
    %834 = vrot.lane.b32.xlu0 %v668, 64
    %v835 = vpop.permute.xlu0 %834
    %836 = vrot.lane.b32.xlu0 %v673, 64
    %v837 = vpop.permute.xlu0 %836
    %840 = vmatprep.subr.mxu0 0.0
    %841 = vmatpush1.msra.mxu0 %v835
    %842 = vmatprep.subr.mxu0 0.0
    %843 = vmatpush1.msra.mxu0 %v837
    %844 = vmatprep.subr.mxu0 0.0
    %845 = vmatpush1.msra.mxu0 0.0
    %846 = vmatprep.subr.mxu0 0.0
    %847 = vmatpush1.msra.mxu0 0.0
    %848 = vmatprep.subr.mxu0 0.0
    %849 = vmatpush1.msra.mxu0 0.0
    %850 = vmatprep.subr.mxu0 0.0
    %851 = vmatpush1.msra.mxu0 0.0
    %852 = vmatprep.subr.mxu0 0.0
    %853 = vmatpush1.msra.mxu0 0.0
    %854 = vmatprep.subr.mxu0 0.0
    %855 = vmatpush1.msra.mxu0 0.0
    %856 = vmatprep.subr.mxu0 0.0
    %857 = vmatpush1.msra.mxu0 0.0
    %858 = vmatprep.subr.mxu0 0.0
    %859 = vmatpush1.msra.mxu0 0.0
    %860 = vmatprep.subr.mxu0 0.0
    %861 = vmatpush1.msra.mxu0 0.0
    %862 = vmatprep.subr.mxu0 0.0
    %863 = vmatpush1.msra.mxu0 0.0
    %864 = vmatprep.subr.mxu0 0.0
    %865 = vmatpush1.msra.mxu0 0.0
    %866 = vmatprep.subr.mxu0 0.0
    %867 = vmatpush1.msra.mxu0 0.0
    %868 = vmatprep.subr.mxu0 0.0
    %869 = vmatpush1.msra.mxu0 0.0
    %870 = vmatprep.subr.mxu0 0.0
    %871 = vmatpush1.msra.mxu0 0.0
    %872 = vmatprep.subr.mxu0 0.0
    %873 = vmatpush1.msra.mxu0 0.0
    %874 = vmatprep.subr.mxu0 0.0
    %875 = vmatpush1.msra.mxu0 0.0
    %876 = vmatprep.subr.mxu0 0.0
    %877 = vmatpush1.msra.mxu0 0.0
    %878 = vmatprep.subr.mxu0 0.0
    %879 = vmatpush1.msra.mxu0 0.0
    %880 = vmatprep.subr.mxu0 0.0
    %881 = vmatpush1.msra.mxu0 0.0
    %882 = vmatprep.subr.mxu0 0.0
    %883 = vmatpush1.msra.mxu0 0.0
    %884 = vmatprep.subr.mxu0 0.0
    %885 = vmatpush1.msra.mxu0 0.0
    %886 = vmatprep.subr.mxu0 0.0
    %887 = vmatpush1.msra.mxu0 0.0
    %888 = vmatprep.subr.mxu0 0.0
    %889 = vmatpush1.msra.mxu0 0.0
    %890 = vmatprep.subr.mxu0 0.0
    %891 = vmatpush1.msra.mxu0 0.0
    %892 = vmatprep.subr.mxu0 0.0
    %893 = vmatpush1.msra.mxu0 0.0
    %894 = vmatprep.subr.mxu0 0.0
    %895 = vmatpush1.msra.mxu0 0.0
    %896 = vmatprep.subr.mxu0 0.0
    %897 = vmatpush1.msra.mxu0 0.0
    %898 = vmatprep.subr.mxu0 0.0
    %899 = vmatpush1.msra.mxu0 0.0
    %900 = vmatprep.subr.mxu0 0.0
    %901 = vmatpush1.msra.mxu0 0.0
    %902 = vmatprep.subr.mxu0 0.0
    %903 = vmatpush1.msra.mxu0 0.0
    %904 = vmatprep.mubr.f32.mxu0 0.0
    %905 = vmatmul.mubr.f32.gmra.mrb[0].mxu0 %v405
    %v906 = vpop.f32.mrb[0].mxu0
    %v907 = vadd.f32 0.0, %v906
    %v908 = vpop.f32.mrb[0].mxu0
    %909 = vmatprep.mubr.f32.mxu0 0.0
    %910 = vmatmul.mubr.f32.gmra.mrb[0].mxu0 %v408
    %v911 = vpop.f32.mrb[0].mxu0
    %v912 = vadd.f32 0.0, %v911
    %v913 = vpop.f32.mrb[0].mxu0
    %914 = vdwg.mxu0
    %v915 = vadd.f32 %v826, %v907
    %v916 = vadd.f32 %v831, %v912
    %917 = vrot.lane.b32.xlu0 %v668, 32
    %v918 = vpop.permute.xlu0 %917
    %919 = vrot.lane.b32.xlu0 %v673, 32
    %v920 = vpop.permute.xlu0 %919
    %923 = vmatprep.subr.mxu0 0.0
    %924 = vmatpush1.msra.mxu0 %v918
    %925 = vmatprep.subr.mxu0 0.0
    %926 = vmatpush1.msra.mxu0 %v920
    %927 = vmatprep.subr.mxu0 0.0
    %928 = vmatpush1.msra.mxu0 0.0
    %929 = vmatprep.subr.mxu0 0.0
    %930 = vmatpush1.msra.mxu0 0.0
    %931 = vmatprep.subr.mxu0 0.0
    %932 = vmatpush1.msra.mxu0 0.0
    %933 = vmatprep.subr.mxu0 0.0
    %934 = vmatpush1.msra.mxu0 0.0
    %935 = vmatprep.subr.mxu0 0.0
    %936 = vmatpush1.msra.mxu0 0.0
    %937 = vmatprep.subr.mxu0 0.0
    %938 = vmatpush1.msra.mxu0 0.0
    %939 = vmatprep.subr.mxu0 0.0
    %940 = vmatpush1.msra.mxu0 0.0
    %941 = vmatprep.subr.mxu0 0.0
    %942 = vmatpush1.msra.mxu0 0.0
    %943 = vmatprep.subr.mxu0 0.0
    %944 = vmatpush1.msra.mxu0 0.0
    %945 = vmatprep.subr.mxu0 0.0
    %946 = vmatpush1.msra.mxu0 0.0
    %947 = vmatprep.subr.mxu0 0.0
    %948 = vmatpush1.msra.mxu0 0.0
    %949 = vmatprep.subr.mxu0 0.0
    %950 = vmatpush1.msra.mxu0 0.0
    %951 = vmatprep.subr.mxu0 0.0
    %952 = vmatpush1.msra.mxu0 0.0
    %953 = vmatprep.subr.mxu0 0.0
    %954 = vmatpush1.msra.mxu0 0.0
    %955 = vmatprep.subr.mxu0 0.0
    %956 = vmatpush1.msra.mxu0 0.0
    %957 = vmatprep.subr.mxu0 0.0
    %958 = vmatpush1.msra.mxu0 0.0
    %959 = vmatprep.subr.mxu0 0.0
    %960 = vmatpush1.msra.mxu0 0.0
    %961 = vmatprep.subr.mxu0 0.0
    %962 = vmatpush1.msra.mxu0 0.0
    %963 = vmatprep.subr.mxu0 0.0
    %964 = vmatpush1.msra.mxu0 0.0
    %965 = vmatprep.subr.mxu0 0.0
    %966 = vmatpush1.msra.mxu0 0.0
    %967 = vmatprep.subr.mxu0 0.0
    %968 = vmatpush1.msra.mxu0 0.0
    %969 = vmatprep.subr.mxu0 0.0
    %970 = vmatpush1.msra.mxu0 0.0
    %971 = vmatprep.subr.mxu0 0.0
    %972 = vmatpush1.msra.mxu0 0.0
    %973 = vmatprep.subr.mxu0 0.0
    %974 = vmatpush1.msra.mxu0 0.0
    %975 = vmatprep.subr.mxu0 0.0
    %976 = vmatpush1.msra.mxu0 0.0
    %977 = vmatprep.subr.mxu0 0.0
    %978 = vmatpush1.msra.mxu0 0.0
    %979 = vmatprep.subr.mxu0 0.0
    %980 = vmatpush1.msra.mxu0 0.0
    %981 = vmatprep.subr.mxu0 0.0
    %982 = vmatpush1.msra.mxu0 0.0
    %983 = vmatprep.subr.mxu0 0.0
    %984 = vmatpush1.msra.mxu0 0.0
    %985 = vmatprep.subr.mxu0 0.0
    %986 = vmatpush1.msra.mxu0 0.0
    %987 = vmatprep.mubr.f32.mxu0 0.0
    %988 = vmatmul.mubr.f32.gmra.mrb[0].mxu0 %v497
    %v989 = vpop.f32.mrb[0].mxu0
    %v990 = vadd.f32 0.0, %v989
    %v991 = vpop.f32.mrb[0].mxu0
    %992 = vmatprep.mubr.f32.mxu0 0.0
    %993 = vmatmul.mubr.f32.gmra.mrb[0].mxu0 %v500
    %v994 = vpop.f32.mrb[0].mxu0
    %v995 = vadd.f32 0.0, %v994
    %v996 = vpop.f32.mrb[0].mxu0
    %997 = vdwg.mxu0
    %v998 = vadd.f32 %v915, %v990
    %v999 = vadd.f32 %v916, %v995
    %1000 = vst.msk [vmem:[#allocation15] sm:$0xff] %vm137, %v131
    %1001 = vst.msk [vmem:[#allocation15 + $0x8] sm:$0xff] %vm137, %v132
    %1004 = vrot.lane.b32.xlu0 %v998, 32
    %v1005 = vpop.permute.xlu0 %1004
    %1006 = vrot.lane.b32.xlu0 %v999, 32
    %v1007 = vpop.permute.xlu0 %1006
    %vm1010 = vcmask 523520
    %1011 = vst.msk [vmem:[#allocation15] sm:$0xff] %vm1010, %v1005
    %1012 = vst.msk [vmem:[#allocation15 + $0x8] sm:$0xff] %vm1010, %v1007
    %v1013 = vld [vmem:[#allocation10] sm:$0xff]
    %v1014 = vld [vmem:[#allocation10 + $0x8] sm:$0xff]
    %v1015 = vld [vmem:[#allocation10 + $0x10] sm:$0xff]
    %v1016 = vld [vmem:[#allocation10 + $0x18] sm:$0xff]
    %v1017 = vld [vmem:[#allocation11] sm:$0xff]
    %v1018 = vld [vmem:[#allocation11 + $0x8] sm:$0xff]
    %v1019 = vld [vmem:[#allocation11 + $0x10] sm:$0xff]
    %v1020 = vld [vmem:[#allocation11 + $0x18] sm:$0xff]
    %v1021 = vsel %vm137, %v998, 0
    %v1023 = vsel %vm137, %v999, 0
    %1025 = vmatprep.subr.mxu0 0.0
    %1026 = vmatpush1.msra.mxu0 %v1017
    %1027 = vmatprep.subr.mxu0 0.0
    %1028 = vmatpush1.msra.mxu0 %v1018
    %1029 = vmatprep.subr.mxu0 0.0
    %1030 = vmatpush1.msra.mxu0 %v1019
    %1031 = vmatprep.subr.mxu0 0.0
    %1032 = vmatpush1.msra.mxu0 %v1020
    %1033 = vmatprep.subr.mxu0 0.0
    %1034 = vmatpush1.msra.mxu0 0.0
    %1035 = vmatprep.subr.mxu0 0.0
    %1036 = vmatpush1.msra.mxu0 0.0
    %1037 = vmatprep.subr.mxu0 0.0
    %1038 = vmatpush1.msra.mxu0 0.0
    %1039 = vmatprep.subr.mxu0 0.0
    %1040 = vmatpush1.msra.mxu0 0.0
    %1041 = vmatprep.subr.mxu0 0.0
    %1042 = vmatpush1.msra.mxu0 0.0
    %1043 = vmatprep.subr.mxu0 0.0
    %1044 = vmatpush1.msra.mxu0 0.0
    %1045 = vmatprep.subr.mxu0 0.0
    %1046 = vmatpush1.msra.mxu0 0.0
    %1047 = vmatprep.subr.mxu0 0.0
    %1048 = vmatpush1.msra.mxu0 0.0
    %1049 = vmatprep.subr.mxu0 0.0
    %1050 = vmatpush1.msra.mxu0 0.0
    %1051 = vmatprep.subr.mxu0 0.0
    %1052 = vmatpush1.msra.mxu0 0.0
    %1053 = vmatprep.subr.mxu0 0.0
    %1054 = vmatpush1.msra.mxu0 0.0
    %1055 = vmatprep.subr.mxu0 0.0
    %1056 = vmatpush1.msra.mxu0 0.0
    %1057 = vmatprep.subr.mxu0 0.0
    %1058 = vmatpush1.msra.mxu0 0.0
    %1059 = vmatprep.subr.mxu0 0.0
    %1060 = vmatpush1.msra.mxu0 0.0
    %1061 = vmatprep.subr.mxu0 0.0
    %1062 = vmatpush1.msra.mxu0 0.0
    %1063 = vmatprep.subr.mxu0 0.0
    %1064 = vmatpush1.msra.mxu0 0.0
    %1065 = vmatprep.subr.mxu0 0.0
    %1066 = vmatpush1.msra.mxu0 0.0
    %1067 = vmatprep.subr.mxu0 0.0
    %1068 = vmatpush1.msra.mxu0 0.0
    %1069 = vmatprep.subr.mxu0 0.0
    %1070 = vmatpush1.msra.mxu0 0.0
    %1071 = vmatprep.subr.mxu0 0.0
    %1072 = vmatpush1.msra.mxu0 0.0
    %1073 = vmatprep.subr.mxu0 0.0
    %1074 = vmatpush1.msra.mxu0 0.0
    %1075 = vmatprep.subr.mxu0 0.0
    %1076 = vmatpush1.msra.mxu0 0.0
    %1077 = vmatprep.subr.mxu0 0.0
    %1078 = vmatpush1.msra.mxu0 0.0
    %1079 = vmatprep.subr.mxu0 0.0
    %1080 = vmatpush1.msra.mxu0 0.0
    %1081 = vmatprep.subr.mxu0 0.0
    %1082 = vmatpush1.msra.mxu0 0.0
    %1083 = vmatprep.subr.mxu0 0.0
    %1084 = vmatpush1.msra.mxu0 0.0
    %1085 = vmatprep.subr.mxu0 0.0
    %1086 = vmatpush1.msra.mxu0 0.0
    %1087 = vmatprep.subr.mxu0 0.0
    %1088 = vmatpush1.msra.mxu0 0.0
    %1089 = vmatprep.mubr.f32.mxu0 0.0
    %1090 = vmatmul.mubr.f32.gmra.mrb[0].mxu0 %v1021
    %v1091 = vpop.f32.mrb[0].mxu0
    %v1092 = vadd.f32 0.0, %v1091
    %v1093 = vpop.f32.mrb[0].mxu0
    %1094 = vmatprep.mubr.f32.mxu0 0.0
    %1095 = vmatmul.mubr.f32.gmra.mrb[0].mxu0 %v1023
    %v1096 = vpop.f32.mrb[0].mxu0
    %v1097 = vadd.f32 0.0, %v1096
    %v1098 = vpop.f32.mrb[0].mxu0
    %1099 = vdwg.mxu0
    %1100 = vmatprep.subr.mxu0 0.0
    %1101 = vmatpush1.msra.mxu0 %v1013
    %1102 = vmatprep.subr.mxu0 0.0
    %1103 = vmatpush1.msra.mxu0 %v1014
    %1104 = vmatprep.subr.mxu0 0.0
    %1105 = vmatpush1.msra.mxu0 %v1015
    %1106 = vmatprep.subr.mxu0 0.0
    %1107 = vmatpush1.msra.mxu0 %v1016
    %1108 = vmatprep.subr.mxu0 0.0
    %1109 = vmatpush1.msra.mxu0 0.0
    %1110 = vmatprep.subr.mxu0 0.0
    %1111 = vmatpush1.msra.mxu0 0.0
    %1112 = vmatprep.subr.mxu0 0.0
    %1113 = vmatpush1.msra.mxu0 0.0
    %1114 = vmatprep.subr.mxu0 0.0
    %1115 = vmatpush1.msra.mxu0 0.0
    %1116 = vmatprep.subr.mxu0 0.0
    %1117 = vmatpush1.msra.mxu0 0.0
    %1118 = vmatprep.subr.mxu0 0.0
    %1119 = vmatpush1.msra.mxu0 0.0
    %1120 = vmatprep.subr.mxu0 0.0
    %1121 = vmatpush1.msra.mxu0 0.0
    %1122 = vmatprep.subr.mxu0 0.0
    %1123 = vmatpush1.msra.mxu0 0.0
    %1124 = vmatprep.subr.mxu0 0.0
    %1125 = vmatpush1.msra.mxu0 0.0
    %1126 = vmatprep.subr.mxu0 0.0
    %1127 = vmatpush1.msra.mxu0 0.0
    %1128 = vmatprep.subr.mxu0 0.0
    %1129 = vmatpush1.msra.mxu0 0.0
    %1130 = vmatprep.subr.mxu0 0.0
    %1131 = vmatpush1.msra.mxu0 0.0
    %1132 = vmatprep.subr.mxu0 0.0
    %1133 = vmatpush1.msra.mxu0 0.0
    %1134 = vmatprep.subr.mxu0 0.0
    %1135 = vmatpush1.msra.mxu0 0.0
    %1136 = vmatprep.subr.mxu0 0.0
    %1137 = vmatpush1.msra.mxu0 0.0
    %1138 = vmatprep.subr.mxu0 0.0
    %1139 = vmatpush1.msra.mxu0 0.0
    %1140 = vmatprep.subr.mxu0 0.0
    %1141 = vmatpush1.msra.mxu0 0.0
    %1142 = vmatprep.subr.mxu0 0.0
    %1143 = vmatpush1.msra.mxu0 0.0
    %1144 = vmatprep.subr.mxu0 0.0
    %1145 = vmatpush1.msra.mxu0 0.0
    %1146 = vmatprep.subr.mxu0 0.0
    %1147 = vmatpush1.msra.mxu0 0.0
    %1148 = vmatprep.subr.mxu0 0.0
    %1149 = vmatpush1.msra.mxu0 0.0
    %1150 = vmatprep.subr.mxu0 0.0
    %1151 = vmatpush1.msra.mxu0 0.0
    %1152 = vmatprep.subr.mxu0 0.0
    %1153 = vmatpush1.msra.mxu0 0.0
    %1154 = vmatprep.subr.mxu0 0.0
    %1155 = vmatpush1.msra.mxu0 0.0
    %1156 = vmatprep.subr.mxu0 0.0
    %1157 = vmatpush1.msra.mxu0 0.0
    %1158 = vmatprep.subr.mxu0 0.0
    %1159 = vmatpush1.msra.mxu0 0.0
    %1160 = vmatprep.subr.mxu0 0.0
    %1161 = vmatpush1.msra.mxu0 0.0
    %1162 = vmatprep.subr.mxu0 0.0
    %1163 = vmatpush1.msra.mxu0 0.0
    %1164 = vmatprep.mubr.f32.mxu0 0.0
    %1165 = vmatmul.mubr.f32.gmra.mrb[0].mxu0 %v139
    %v1166 = vpop.f32.mrb[0].mxu0
    %v1167 = vadd.f32 %v1092, %v1166
    %v1168 = vpop.f32.mrb[0].mxu0
    %1169 = vmatprep.mubr.f32.mxu0 0.0
    %1170 = vmatmul.mubr.f32.gmra.mrb[0].mxu0 %v142
    %v1171 = vpop.f32.mrb[0].mxu0
    %v1172 = vadd.f32 %v1097, %v1171
    %v1173 = vpop.f32.mrb[0].mxu0
    %1174 = vdwg.mxu0
    %v1175 = vld [vmem:[%s6] sm:$0x1]
    %v1177 = vlaneseq
    %v1178 = vshrl.u32 %v1177, 7
    %v1179 = vsub.s32 0, %v1178
    %v1180 = vrot.slane %v1175, %v1179
    %v1182 = vadd.f32 %v1167, %v1180
    %v1183 = vadd.f32 %v1172, %v1180
    %v1184 = vmax.f32 %v1182, 0.0
    %v1185 = vmax.f32 %v1183, 0.0
    %v1186 = vld [vmem:[#allocation13] sm:$0xff]
    %v1187 = vld [vmem:[#allocation13 + $0x8] sm:$0xff]
    %v1188 = vld [vmem:[#allocation13 + $0x10] sm:$0xff]
    %v1189 = vld [vmem:[#allocation13 + $0x18] sm:$0xff]
    %v1190 = vld [vmem:[%s8] sm:$0x1]
    %v1192 = vlaneseq
    %v1193 = vshrl.u32 %v1192, 7
    %v1194 = vsub.s32 0, %v1193
    %v1195 = vrot.slane %v1190, %v1194
    %v1198 = vsel %vm137, %v1184, 0
    %v1201 = vsel %vm137, %v1185, 0
    %1203 = vmatprep.subr.mxu0 0.0
    %1204 = vmatpush1.msra.mxu0 %v1186
    %1205 = vmatprep.subr.mxu0 0.0
    %1206 = vmatpush1.msra.mxu0 %v1187
    %1207 = vmatprep.subr.mxu0 0.0
    %1208 = vmatpush1.msra.mxu0 %v1188
    %1209 = vmatprep.subr.mxu0 0.0
    %1210 = vmatpush1.msra.mxu0 %v1189
    %1211 = vmatprep.subr.mxu0 0.0
    %1212 = vmatpush1.msra.mxu0 0.0
    %1213 = vmatprep.subr.mxu0 0.0
    %1214 = vmatpush1.msra.mxu0 0.0
    %1215 = vmatprep.subr.mxu0 0.0
    %1216 = vmatpush1.msra.mxu0 0.0
    %1217 = vmatprep.subr.mxu0 0.0
    %1218 = vmatpush1.msra.mxu0 0.0
    %1219 = vmatprep.subr.mxu0 0.0
    %1220 = vmatpush1.msra.mxu0 0.0
    %1221 = vmatprep.subr.mxu0 0.0
    %1222 = vmatpush1.msra.mxu0 0.0
    %1223 = vmatprep.subr.mxu0 0.0
    %1224 = vmatpush1.msra.mxu0 0.0
    %1225 = vmatprep.subr.mxu0 0.0
    %1226 = vmatpush1.msra.mxu0 0.0
    %1227 = vmatprep.subr.mxu0 0.0
    %1228 = vmatpush1.msra.mxu0 0.0
    %1229 = vmatprep.subr.mxu0 0.0
    %1230 = vmatpush1.msra.mxu0 0.0
    %1231 = vmatprep.subr.mxu0 0.0
    %1232 = vmatpush1.msra.mxu0 0.0
    %1233 = vmatprep.subr.mxu0 0.0
    %1234 = vmatpush1.msra.mxu0 0.0
    %1235 = vmatprep.subr.mxu0 0.0
    %1236 = vmatpush1.msra.mxu0 0.0
    %1237 = vmatprep.subr.mxu0 0.0
    %1238 = vmatpush1.msra.mxu0 0.0
    %1239 = vmatprep.subr.mxu0 0.0
    %1240 = vmatpush1.msra.mxu0 0.0
    %1241 = vmatprep.subr.mxu0 0.0
    %1242 = vmatpush1.msra.mxu0 0.0
    %1243 = vmatprep.subr.mxu0 0.0
    %1244 = vmatpush1.msra.mxu0 0.0
    %1245 = vmatprep.subr.mxu0 0.0
    %1246 = vmatpush1.msra.mxu0 0.0
    %1247 = vmatprep.subr.mxu0 0.0
    %1248 = vmatpush1.msra.mxu0 0.0
    %1249 = vmatprep.subr.mxu0 0.0
    %1250 = vmatpush1.msra.mxu0 0.0
    %1251 = vmatprep.subr.mxu0 0.0
    %1252 = vmatpush1.msra.mxu0 0.0
    %1253 = vmatprep.subr.mxu0 0.0
    %1254 = vmatpush1.msra.mxu0 0.0
    %1255 = vmatprep.subr.mxu0 0.0
    %1256 = vmatpush1.msra.mxu0 0.0
    %1257 = vmatprep.subr.mxu0 0.0
    %1258 = vmatpush1.msra.mxu0 0.0
    %1259 = vmatprep.subr.mxu0 0.0
    %1260 = vmatpush1.msra.mxu0 0.0
    %1261 = vmatprep.subr.mxu0 0.0
    %1262 = vmatpush1.msra.mxu0 0.0
    %1263 = vmatprep.subr.mxu0 0.0
    %1264 = vmatpush1.msra.mxu0 0.0
    %1265 = vmatprep.subr.mxu0 0.0
    %1266 = vmatpush1.msra.mxu0 0.0
    %1267 = vmatprep.mubr.f32.mxu0 0.0
    %1268 = vmatmul.mubr.f32.gmra.mrb[0].mxu0 %v1198
    %v1269 = vpop.f32.mrb[0].mxu0
    %v1270 = vadd.f32 %v1195, %v1269
    %v1271 = vpop.f32.mrb[0].mxu0
    %1272 = vmatprep.mubr.f32.mxu0 0.0
    %1273 = vmatmul.mubr.f32.gmra.mrb[0].mxu0 %v1201
    %v1274 = vpop.f32.mrb[0].mxu0
    %v1275 = vadd.f32 %v1195, %v1274
    %v1276 = vpop.f32.mrb[0].mxu0
    %1277 = vdwg.mxu0
    %1278 = vmax.xlane.f32.xlu0 %v1270
    %v1279 = vpop.xlane.xlu0 %1278
    %1280 = vmax.xlane.f32.xlu0 %v1275
    %v1281 = vpop.xlane.xlu0 %1280
    %v1282 = vsub.f32 %v1270, %v1279
    %v1283 = vsub.f32 %v1275, %v1281
    %v1284 = vmul.f32 %v1282, 1.442695
    %v1285 = vpow.pop %v1284
    %v1286 = vmul.f32 %v1283, 1.442695
    %v1287 = vpow.pop %v1286
    %1288 = vadd.xlane.f32.xlu0 %v1285
    %v1289 = vpop.xlane.xlu0 %1288
    %1290 = vadd.xlane.f32.xlu0 %v1287
    %v1291 = vpop.xlane.xlu0 %1290
    %v1292 = vlog2.pop %v1289
    %v1293 = vmul.f32 %v1292, 0.6931472
    %v1294 = vlog2.pop %v1291
    %v1295 = vmul.f32 %v1294, 0.6931472
    %v1296 = vsub.f32 %v1282, %v1293
    %v1297 = vsub.f32 %v1283, %v1295
    %1298 = vst [vmem:[#allocation14] sm:$0xff] %v1296
    %1299 = vst [vmem:[#allocation14 + $0x8] sm:$0xff] %v1297
    // Predicated region
    $region66: #{tpu_custom_call.1} parent=1 // pred_check
      _
    $region67: #{tpu_custom_call.1} parent=1 // pred_check_branch
      %1301 = sbr.rel (0) target = $region69
    $region68: #{tpu_custom_call.1} parent=1 // pred_region
      %s1303 = ssub.s32 256, 256
      %1304 = vsyncadd [#allocation4], %s1303
      %s1305 = sshll.u32 [#allocation14], 4
      %s1306 = int_to_ptr.vmem [resolvable:$true] %s1305
      %1311 = dma.vmem_to_hbm [thread:$0]  %s1306, 256, %s9, [#allocation4], 128, 128, 8
    $region69: #{tpu_custom_call.1} parent=1 // pred_fallthru
      _
    // Predicated region
    $region70: #{tpu_custom_call.1} parent=1 // pred_check
      _
    $region71: #{tpu_custom_call.1} parent=1 // pred_check_branch
      %1313 = sbr.rel (0) target = $region73
    $region72: #{tpu_custom_call.1} parent=1 // pred_region
      %s1315 = ssub.s32 256, 256
      %1316 = vsyncadd [#allocation16], %s1315
      %s1317 = sshll.u32 [#allocation15], 4
      %s1318 = int_to_ptr.vmem [resolvable:$true] %s1317
      %1323 = dma.vmem_to_hbm [thread:$0]  %s1318, 256, %s10, [#allocation16], 128, 128, 8
    $region73: #{tpu_custom_call.1} parent=1 // pred_fallthru
      _
    // Predicated region
    $region74: #{tpu_custom_call.1} parent=1 // pred_check
      _
    $region75: #{tpu_custom_call.1} parent=1 // pred_check_branch
      %1325 = sbr.rel (0) target = $region77
    $region76: #{tpu_custom_call.1} parent=1 // pred_region
      %1326 = dma.done [#allocation4], 256
    $region77: #{tpu_custom_call.1} parent=1 // pred_fallthru
      _
    // Predicated region
    $region78: #{tpu_custom_call.1} parent=1 // pred_check
      _
    $region79: #{tpu_custom_call.1} parent=1 // pred_check_branch
      %1328 = sbr.rel (0) target = $region81
    $region80: #{tpu_custom_call.1} parent=1 // pred_region
      %1329 = dma.done [#allocation16], 256
    $region81: #{tpu_custom_call.1} parent=1 // pred_fallthru
      _
    %1330 = vsyncpa [#allocation3], 1
    %1331 = vsyncpa [#allocation6], 1
    %1332 = vsyncpa [#allocation9], 1
    %1333 = vsyncpa [#allocation12], 1
    %1334 = vsyncpa [#allocation4], 1
    %1335 = vsyncpa [#allocation16], 1

</llo_original>
